<compile_context>
chip_gen: v7x
topology: tpu7x:2x2x1
jax: 0.10.0
libtpu: 0.0.40
codegen_flags: <defaults>
</compile_context>

<pallas_src>
import jax
import jax.numpy as jnp
from jax.experimental import pallas as pl
from jax.experimental.pallas import tpu as pltpu

FEAT = 16         # appear_len == point_len == mlp1[-1] == mlp2[-1]
NSAMPLE_Q = 4     # K nearest neighbors
TILE_N_MAX = 256  # queries per grid step (lane axis); padded to a multiple of 128


# ----------------------------- Pallas kernel --------------------------------

def cost_volume_kernel(pi_xyz_ref, qi_xyz_ref, pi_pts_ref, qi_pts_ref,
                       w_p_ref, b_p_ref, w_i_ref, b_i_ref,
                       w_enc_q_ref, w_enc_k_ref, w_enc_e_ref, b_enc_ref,
                       w_m0a_ref, w_m0b_ref, b_m0_ref,
                       w_m1_ref, b_m1_ref,
                       out_ref):
    # Layout: channels (and neighbor index) on sublanes, queries on the lane axis.
    #   pi_xyz [2, TN], qi_xyz [S, 2, TN], pi_pts [C, TN], qi_pts [S, C, TN]
    s_n = qi_pts_ref.shape[0]
    c = pi_pts_ref.shape[0]

    pi_xyz = pi_xyz_ref[...]                       # [2, TN]
    pi_pts = pi_pts_ref[...]                       # [C, TN]

    w_p = w_p_ref[...]; b_p = b_p_ref[...]         # packed [gate_p | input_p]
    w_i = w_i_ref[...]; b_i = b_i_ref[...]         # packed [gate_i | input_i]
    w_enc_q = w_enc_q_ref[...]; w_enc_k = w_enc_k_ref[...]
    w_enc_e = w_enc_e_ref[...]; b_enc = b_enc_ref[...]
    w_m0a = w_m0a_ref[...]; w_m0b = w_m0b_ref[...]; b_m0 = b_m0_ref[...]
    w_m1 = w_m1_ref[...]; b_m1 = b_m1_ref[...]

    def outer2(w2, x2):
        # [C, 2] x [2, TN] -> [C, TN] via two broadcast MACs (avoids a K=2 matmul)
        return w2[:, 0:1] * x2[0:1, :] + w2[:, 1:2] * x2[1:2, :]

    # -------- query-only (S-invariant) work, hoisted out of the neighbor loop ----
    gi_all = jnp.dot(w_i, pi_pts, preferred_element_type=jnp.float32) + b_i    # [2C, TN]
    gate_i = jax.nn.sigmoid(gi_all[0:c, :])                                    # [C, TN]
    gi_inp = gate_i * gi_all[c:2 * c, :]                                       # gate_i * input_i
    enc_q = outer2(w_enc_q, pi_xyz) + b_enc                                    # [C, TN]

    # -------- per-neighbor loop with online softmax over the neighbor axis -------
    m_run = None
    l_run = None
    acc = None
    for s in range(s_n):
        x_s = qi_pts_ref[s]                        # [C, TN] grouped src features
        q_s = qi_xyz_ref[s]                        # [2, TN] grouped src coords

        # gated fusion (gate_p and input_p fused into one packed matmul)
        gp_all = jnp.dot(w_p, x_s, preferred_element_type=jnp.float32) + b_p   # [2C, TN]
        gate_p = jax.nn.sigmoid(gp_all[0:c, :])
        fused = gate_p * gp_all[c:2 * c, :] + gi_inp
        feat_s = fused * pl.reciprocal(gate_p + gate_i, approx=True)           # [C, TN]

        # geometric encoding: [pi_xyz | qi_xyz | diff | euclid] (7 ch) folded into
        # split weights (diff term algebraically merged into the q/k weights).
        dx = q_s[0:1, :] - pi_xyz[0:1, :]
        dy = q_s[1:2, :] - pi_xyz[1:2, :]
        euc = jnp.sqrt(dx * dx + dy * dy + 1e-20)                              # [1, TN]
        enc_s = jnp.maximum(enc_q + outer2(w_enc_k, q_s) + w_enc_e * euc, 0.0)

        # mlp2 chain on concat([enc, feat]) via split weights
        h = (jnp.dot(w_m0a, enc_s, preferred_element_type=jnp.float32)
             + jnp.dot(w_m0b, feat_s, preferred_element_type=jnp.float32) + b_m0)
        h = jnp.maximum(h, 0.0)
        logit = jnp.maximum(
            jnp.dot(w_m1, h, preferred_element_type=jnp.float32) + b_m1, 0.0)  # [C, TN]

        # online softmax over neighbors, weighted sum of feat
        if s == 0:
            m_run = logit
            l_run = jnp.ones_like(logit)
            acc = feat_s
        else:
            m_new = jnp.maximum(m_run, logit)
            alpha = jnp.exp(m_run - m_new)
            p = jnp.exp(logit - m_new)
            l_run = alpha * l_run + p
            acc = alpha * acc + p * feat_s
            m_run = m_new

    out_ref[...] = (acc * pl.reciprocal(l_run, approx=True)).astype(out_ref.dtype)


# ----------------------------- JAX glue --------------------------------------

def cost_volume_pallas(warped_xyz, warped_points, f2_xyz, f2_points, params,
                       nsample_q, tile_n_max=TILE_N_MAX):
    """warped_xyz [1,N,2], warped_points [1,N,C], f2_xyz [1,M,2], f2_points [1,M,C]
    -> [1, C, N]  (channels-first; mlp2[-1] == C)"""
    b, n, _ = warped_xyz.shape
    assert b == 1
    m = f2_xyz.shape[1]
    k = min(nsample_q, m)
    c = warped_points.shape[-1]

    # kNN + gather (data-dependent; kept in plain JAX glue).
    # TODO(synk): could move this gather in-kernel via PrefetchScalarGridSpec to
    # avoid materializing the K-duplicated grouped features in HBM.
    d2 = jnp.sum((warped_xyz[:, :, None, :] - f2_xyz[:, None, :, :]) ** 2, axis=-1)
    _, idx = jax.lax.top_k(-d2, k)                           # [1, N, K]
    idx0 = idx[0]
    qi_xyz_g = f2_xyz[0][idx0]                               # [N, K, 2]
    qi_pts_g = f2_points[0][idx0]                            # [N, K, C]

    # Relayout: queries on the 128-lane axis, channels/neighbors on sublanes.
    pi_xyz_t = warped_xyz[0].T.astype(jnp.float32)                       # [2, N]
    pi_pts_t = warped_points[0].T.astype(jnp.float32)                    # [C, N]
    qi_xyz_t = jnp.transpose(qi_xyz_g, (1, 2, 0)).astype(jnp.float32)    # [K, 2, N]
    qi_pts_t = jnp.transpose(qi_pts_g, (1, 2, 0)).astype(jnp.float32)    # [K, C, N]

    # Lane-dense padding of the query axis + tile choice.
    if n >= tile_n_max:
        tile_n = tile_n_max
    else:
        tile_n = ((n + 127) // 128) * 128
    n_pad = ((n + tile_n - 1) // tile_n) * tile_n
    pad = n_pad - n
    if pad:
        pi_xyz_t = jnp.pad(pi_xyz_t, ((0, 0), (0, pad)))
        pi_pts_t = jnp.pad(pi_pts_t, ((0, 0), (0, pad)))
        qi_xyz_t = jnp.pad(qi_xyz_t, ((0, 0), (0, 0), (0, pad)))
        qi_pts_t = jnp.pad(qi_pts_t, ((0, 0), (0, 0), (0, pad)))

    grid = (n_pad // tile_n,)
    in_specs = ([pl.BlockSpec((2, tile_n), lambda i: (0, i)),
                 pl.BlockSpec((k, 2, tile_n), lambda i: (0, 0, i)),
                 pl.BlockSpec((c, tile_n), lambda i: (0, i)),
                 pl.BlockSpec((k, c, tile_n), lambda i: (0, 0, i))]
                + [pl.BlockSpec(p.shape, lambda i, _nd=p.ndim: (0,) * _nd)
                   for p in params])
    out_spec = pl.BlockSpec((c, tile_n), lambda i: (0, i))   # lane-dense store

    out = pl.pallas_call(
        cost_volume_kernel,
        out_shape=jax.ShapeDtypeStruct((c, n_pad), jnp.float32),
        grid=grid,
        in_specs=in_specs,
        out_specs=out_spec,
        compiler_params=pltpu.CompilerParams(dimension_semantics=("parallel",)),
    )(pi_xyz_t, qi_xyz_t, pi_pts_t, qi_pts_t, *params)
    return out[None, :, :n]                                  # [1, C, N]


def grid_generator(w, h):
    """Reproduces torch Grid_generator: meshgrid over (W, H), flattened w-major."""
    gx = jnp.linspace(0.5, w - 0.5, w)
    gy = jnp.linspace(0.5, h - 0.5, h)
    grid_x, grid_y = jnp.meshgrid(gx, gy, indexing="ij")      # [w, h]
    xy = jnp.stack([grid_x.reshape(-1), grid_y.reshape(-1)], axis=1)[None]
    return xy.astype(jnp.float32)                             # [1, w*h, 2]


def _project(xy, m_mat):
    l = xy.shape[2]
    proj_xyz = jnp.concatenate([xy, jnp.ones((1, 1, l), xy.dtype)], axis=1)  # [1,3,L]
    proj = jnp.matmul(m_mat, proj_xyz)[:, :2, :]
    return jnp.transpose(proj, (0, 2, 1))                     # [1, L, 2]


def points_centered_sample_group(xy, pts, img, m_mat, params, nsample_q):
    bi, c, h, w = img.shape
    img_d = jnp.transpose(img, (0, 2, 3, 1)).reshape(bi, h * w, c)
    proj_pts = _project(xy, m_mat)
    img_xy = grid_generator(w, h)
    pts_t = jnp.transpose(pts, (0, 2, 1))
    # kernel already returns channels-first [1, C', L]
    return cost_volume_pallas(proj_pts, pts_t, img_xy, img_d, params, nsample_q)


def pixels_centered_sample_group(xy, pts, img, m_mat, params, nsample_q):
    bi, c, h, w = img.shape
    img_d = jnp.transpose(img, (0, 2, 3, 1)).reshape(bi, h * w, c)
    proj_pts = _project(xy, m_mat)
    img_xy = grid_generator(w, h)
    pts_t = jnp.transpose(pts, (0, 2, 1))
    out = cost_volume_pallas(img_xy, img_d, proj_pts, pts_t, params, nsample_q)
    return out.reshape(bi, -1, h, w)                          # torch's reshape convention


def fuse_extract_forward(xys, imgs, points, points_split, m_matrixes,
                         params_pc, params_px, nsample_q=NSAMPLE_Q):
    fused_img_list, fused_points_list = [], []
    for i in range(len(points_split) - 1):
        start, end = int(points_split[i]), int(points_split[i + 1])
        xy = xys[:, :, start:end]
        pts = points[:, :, start:end]
        img = imgs[i:i + 1]
        m_mat = m_matrixes[i:i + 1]
        feat1 = points_centered_sample_group(xy, pts, img, m_mat, params_pc, nsample_q)
        feat2 = pixels_centered_sample_group(xy, pts, img, m_mat, params_px, nsample_q)
        fused_points_list.append(feat1)
        fused_img_list.append(feat2)
    fused_imgs = jnp.concatenate(fused_img_list, axis=0)
    fused_points = jnp.concatenate(fused_points_list, axis=-1)
    return fused_imgs, fused_points


# ----------------------------- parameter init --------------------------------

def init_cost_volume_params(key, c=FEAT, eps=1e-5):
    """Random params in the packed / transposed layout the kernel expects."""
    ks = list(jax.random.split(key, 10))

    def conv_w(k, cin, cout, scale=0.2):
        kw, kb = jax.random.split(k)
        return (scale * jax.random.normal(kw, (cin, cout), jnp.float32),
                scale * jax.random.normal(kb, (1, cout), jnp.float32))

    def bn_p(k, cout):
        kg, kb, km, kv = jax.random.split(k, 4)
        gamma = 1.0 + 0.1 * jax.random.normal(kg, (cout,), jnp.float32)
        beta = 0.1 * jax.random.normal(kb, (cout,), jnp.float32)
        mean = 0.1 * jax.random.normal(km, (cout,), jnp.float32)
        var = 0.5 + 0.1 * jnp.abs(jax.random.normal(kv, (cout,), jnp.float32))
        return gamma, beta, mean, var

    def fold(w, bias, bn):
        gamma, beta, mean, var = bn
        s = gamma / jnp.sqrt(var + eps)
        return w * s[None, :], (bias - mean[None, :]) * s[None, :] + beta[None, :]

    wgp, bgp = conv_w(ks[0], c, c)          # gate_p  (conv + sigmoid, no BN)
    wgi, bgi = conv_w(ks[1], c, c)          # gate_i
    wip, bip = conv_w(ks[2], c, c)          # input_p
    wii, bii = conv_w(ks[3], c, c)          # input_i
    wpe, bpe = fold(*conv_w(ks[4], 7, c), bn_p(ks[5], c))       # pi_encoding conv+BN
    wm0, bm0 = fold(*conv_w(ks[6], 2 * c, c), bn_p(ks[7], c))   # mlp2_convs[0]
    wm1, bm1 = fold(*conv_w(ks[8], c, c), bn_p(ks[9], c))       # mlp2_convs[1]

    # pack / transpose for the lane-relayout kernel (W rows = output channels)
    w_p = jnp.concatenate([wgp, wip], axis=1).T               # [2C, C]
    b_p = jnp.concatenate([bgp, bip], axis=1).T               # [2C, 1]
    w_i = jnp.concatenate([wgi, wii], axis=1).T               # [2C, C]
    b_i = jnp.concatenate([bgi, bii], axis=1).T               # [2C, 1]
    # enc = wpe[0:2].x_q + wpe[2:4].x_k + wpe[4:6].(x_k - x_q) + wpe[6].euc + bpe
    w_enc_q = (wpe[0:2] - wpe[4:6]).T                         # [C, 2]
    w_enc_k = (wpe[2:4] + wpe[4:6]).T                         # [C, 2]
    w_enc_e = wpe[6:7].T                                      # [C, 1]
    b_enc = bpe.T                                             # [C, 1]
    w_m0a = wm0[:c].T                                         # [C, C] (enc half)
    w_m0b = wm0[c:].T                                         # [C, C] (feat half)
    b_m0 = bm0.T                                              # [C, 1]
    w_m1 = wm1.T                                              # [C, C]
    b_m1 = bm1.T                                              # [C, 1]
    return (w_p, b_p, w_i, b_i, w_enc_q, w_enc_k, w_enc_e, b_enc,
            w_m0a, w_m0b, b_m0, w_m1, b_m1)


# ----------------------------- demo -------------------------------------------

if __name__ == "__main__":
    key = jax.random.PRNGKey(0)
    k1, k2, k3, k4, kp1, kp2 = jax.random.split(key, 6)

    H = W = 8
    C = FEAT
    L = 16
    points_split = [0, 8, 16]
    n_frames = len(points_split) - 1

    xys = jax.random.uniform(k1, (1, 2, L), jnp.float32, 0.0, float(W))   # 1 x 2 x L
    imgs = jax.random.normal(k2, (n_frames, C, H, W), jnp.float32)        # (N+M) x C x H x W
    points = jax.random.normal(k3, (1, C, L), jnp.float32)                # 1 x D x L
    M_matrixes = (jnp.tile(jnp.eye(3, dtype=jnp.float32)[None], (n_frames, 1, 1))
                  + 0.01 * jax.random.normal(k4, (n_frames, 3, 3), jnp.float32))

    params_pc = init_cost_volume_params(kp1)   # cost_points_centered
    params_px = init_cost_volume_params(kp2)   # cost_pixels_centered

    fused_imgs, fused_points = fuse_extract_forward(
        xys, imgs, points, points_split, M_matrixes, params_pc, params_px)
    jax.block_until_ready((fused_imgs, fused_points))

    assert fused_imgs.shape == (n_frames, FEAT, H, W)
    assert fused_points.shape == (1, FEAT, L)
    print("KERNEL_OK")
</pallas_src>

<mosaic_0001>
module attributes {stable_mosaic.version = 11 : i64} {
  func.func @cost_volume_kernel(%arg0: i32, %arg1: memref<2x128xf32, #tpu.memory_space<vmem>>, %arg2: memref<4x2x128xf32, #tpu.memory_space<vmem>>, %arg3: memref<16x128xf32, #tpu.memory_space<vmem>>, %arg4: memref<4x16x128xf32, #tpu.memory_space<vmem>>, %arg5: memref<32x16xf32, #tpu.memory_space<vmem>>, %arg6: memref<32x1xf32, #tpu.memory_space<vmem>>, %arg7: memref<32x16xf32, #tpu.memory_space<vmem>>, %arg8: memref<32x1xf32, #tpu.memory_space<vmem>>, %arg9: memref<16x2xf32, #tpu.memory_space<vmem>>, %arg10: memref<16x2xf32, #tpu.memory_space<vmem>>, %arg11: memref<16x1xf32, #tpu.memory_space<vmem>>, %arg12: memref<16x1xf32, #tpu.memory_space<vmem>>, %arg13: memref<16x16xf32, #tpu.memory_space<vmem>>, %arg14: memref<16x16xf32, #tpu.memory_space<vmem>>, %arg15: memref<16x1xf32, #tpu.memory_space<vmem>>, %arg16: memref<16x16xf32, #tpu.memory_space<vmem>>, %arg17: memref<16x1xf32, #tpu.memory_space<vmem>>, %arg18: memref<16x128xf32, #tpu.memory_space<vmem>>) attributes {dimension_semantics = [#tpu.dimension_semantics<parallel>], iteration_bounds = array<i64: 1>, scalar_prefetch = 0 : i64, scratch_operands = 0 : i64, tpu.core_type = #tpu.core_type<tc>, window_params = [{transform_indices = @transform_0, window_bounds = array<i64: 2, 128>}, {transform_indices = @transform_1, window_bounds = array<i64: 4, 2, 128>}, {transform_indices = @transform_2, window_bounds = array<i64: 16, 128>}, {transform_indices = @transform_3, window_bounds = array<i64: 4, 16, 128>}, {pipeline_mode = #tpu.pipeline_mode<synchronous>, transform_indices = @transform_4, window_bounds = array<i64: 32, 16>}, {pipeline_mode = #tpu.pipeline_mode<synchronous>, transform_indices = @transform_5, window_bounds = array<i64: 32, 1>}, {pipeline_mode = #tpu.pipeline_mode<synchronous>, transform_indices = @transform_6, window_bounds = array<i64: 32, 16>}, {pipeline_mode = #tpu.pipeline_mode<synchronous>, transform_indices = @transform_7, window_bounds = array<i64: 32, 1>}, {pipeline_mode = #tpu.pipeline_mode<synchronous>, transform_indices = @transform_8, window_bounds = array<i64: 16, 2>}, {pipeline_mode = #tpu.pipeline_mode<synchronous>, transform_indices = @transform_9, window_bounds = array<i64: 16, 2>}, {pipeline_mode = #tpu.pipeline_mode<synchronous>, transform_indices = @transform_10, window_bounds = array<i64: 16, 1>}, {pipeline_mode = #tpu.pipeline_mode<synchronous>, transform_indices = @transform_11, window_bounds = array<i64: 16, 1>}, {pipeline_mode = #tpu.pipeline_mode<synchronous>, transform_indices = @transform_12, window_bounds = array<i64: 16, 16>}, {pipeline_mode = #tpu.pipeline_mode<synchronous>, transform_indices = @transform_13, window_bounds = array<i64: 16, 16>}, {pipeline_mode = #tpu.pipeline_mode<synchronous>, transform_indices = @transform_14, window_bounds = array<i64: 16, 1>}, {pipeline_mode = #tpu.pipeline_mode<synchronous>, transform_indices = @transform_15, window_bounds = array<i64: 16, 16>}, {pipeline_mode = #tpu.pipeline_mode<synchronous>, transform_indices = @transform_16, window_bounds = array<i64: 16, 1>}, {transform_indices = @transform_17, window_bounds = array<i64: 16, 128>}]} {
    %c0 = arith.constant 0 : index
    %c0_0 = arith.constant 0 : index
    %0 = vector.load %arg1[%c0, %c0_0] : memref<2x128xf32, #tpu.memory_space<vmem>>, vector<2x128xf32>
    %c0_1 = arith.constant 0 : index
    %c0_2 = arith.constant 0 : index
    %1 = vector.load %arg3[%c0_1, %c0_2] : memref<16x128xf32, #tpu.memory_space<vmem>>, vector<16x128xf32>
    %c0_3 = arith.constant 0 : index
    %c0_4 = arith.constant 0 : index
    %2 = vector.load %arg5[%c0_3, %c0_4] : memref<32x16xf32, #tpu.memory_space<vmem>>, vector<32x16xf32>
    %c0_5 = arith.constant 0 : index
    %c0_6 = arith.constant 0 : index
    %3 = vector.load %arg6[%c0_5, %c0_6] : memref<32x1xf32, #tpu.memory_space<vmem>>, vector<32x1xf32>
    %c0_7 = arith.constant 0 : index
    %c0_8 = arith.constant 0 : index
    %4 = vector.load %arg7[%c0_7, %c0_8] : memref<32x16xf32, #tpu.memory_space<vmem>>, vector<32x16xf32>
    %c0_9 = arith.constant 0 : index
    %c0_10 = arith.constant 0 : index
    %5 = vector.load %arg8[%c0_9, %c0_10] : memref<32x1xf32, #tpu.memory_space<vmem>>, vector<32x1xf32>
    %c0_11 = arith.constant 0 : index
    %c0_12 = arith.constant 0 : index
    %6 = vector.load %arg9[%c0_11, %c0_12] : memref<16x2xf32, #tpu.memory_space<vmem>>, vector<16x2xf32>
    %c0_13 = arith.constant 0 : index
    %c0_14 = arith.constant 0 : index
    %7 = vector.load %arg10[%c0_13, %c0_14] : memref<16x2xf32, #tpu.memory_space<vmem>>, vector<16x2xf32>
    %c0_15 = arith.constant 0 : index
    %c0_16 = arith.constant 0 : index
    %8 = vector.load %arg11[%c0_15, %c0_16] : memref<16x1xf32, #tpu.memory_space<vmem>>, vector<16x1xf32>
    %c0_17 = arith.constant 0 : index
    %c0_18 = arith.constant 0 : index
    %9 = vector.load %arg12[%c0_17, %c0_18] : memref<16x1xf32, #tpu.memory_space<vmem>>, vector<16x1xf32>
    %c0_19 = arith.constant 0 : index
    %c0_20 = arith.constant 0 : index
    %10 = vector.load %arg13[%c0_19, %c0_20] : memref<16x16xf32, #tpu.memory_space<vmem>>, vector<16x16xf32>
    %c0_21 = arith.constant 0 : index
    %c0_22 = arith.constant 0 : index
    %11 = vector.load %arg14[%c0_21, %c0_22] : memref<16x16xf32, #tpu.memory_space<vmem>>, vector<16x16xf32>
    %c0_23 = arith.constant 0 : index
    %c0_24 = arith.constant 0 : index
    %12 = vector.load %arg15[%c0_23, %c0_24] : memref<16x1xf32, #tpu.memory_space<vmem>>, vector<16x1xf32>
    %c0_25 = arith.constant 0 : index
    %c0_26 = arith.constant 0 : index
    %13 = vector.load %arg16[%c0_25, %c0_26] : memref<16x16xf32, #tpu.memory_space<vmem>>, vector<16x16xf32>
    %c0_27 = arith.constant 0 : index
    %c0_28 = arith.constant 0 : index
    %14 = vector.load %arg17[%c0_27, %c0_28] : memref<16x1xf32, #tpu.memory_space<vmem>>, vector<16x1xf32>
    %cst = arith.constant dense<0.000000e+00> : vector<32x128xf32>
    %15 = tpu.matmul %4, %1, %cst {dimension_numbers = #tpu.dot_dimension_numbers<[1], [0], [0], [1], [0, 0, 1, 1], [], []>} : vector<32x16xf32>, vector<16x128xf32>, vector<32x128xf32> -> vector<32x128xf32>
    %16 = vector.broadcast %5 : vector<32x1xf32> to vector<32x128xf32>
    %17 = arith.addf %15, %16 : vector<32x128xf32>
    %18 = vector.extract_strided_slice %17 {offsets = [0, 0], sizes = [16, 128], strides = [1, 1]} : vector<32x128xf32> to vector<16x128xf32>
    %19 = arith.negf %18 : vector<16x128xf32>
    %20 = math.exp %19 : vector<16x128xf32>
    %cst_29 = arith.constant 1.000000e+00 : f32
    %21 = vector.broadcast %cst_29 : f32 to vector<16x128xf32>
    %22 = arith.addf %21, %20 : vector<16x128xf32>
    %23 = arith.divf %21, %22 : vector<16x128xf32>
    %24 = vector.extract_strided_slice %17 {offsets = [16, 0], sizes = [16, 128], strides = [1, 1]} : vector<32x128xf32> to vector<16x128xf32>
    %25 = arith.mulf %23, %24 : vector<16x128xf32>
    %26 = vector.extract_strided_slice %6 {offsets = [0, 0], sizes = [16, 1], strides = [1, 1]} : vector<16x2xf32> to vector<16x1xf32>
    %27 = vector.extract_strided_slice %0 {offsets = [0, 0], sizes = [1, 128], strides = [1, 1]} : vector<2x128xf32> to vector<1x128xf32>
    %28 = vector.broadcast %26 : vector<16x1xf32> to vector<16x128xf32>
    %29 = vector.broadcast %27 : vector<1x128xf32> to vector<16x128xf32>
    %30 = arith.mulf %28, %29 : vector<16x128xf32>
    %31 = vector.extract_strided_slice %6 {offsets = [0, 1], sizes = [16, 1], strides = [1, 1]} : vector<16x2xf32> to vector<16x1xf32>
    %32 = vector.extract_strided_slice %0 {offsets = [1, 0], sizes = [1, 128], strides = [1, 1]} : vector<2x128xf32> to vector<1x128xf32>
    %33 = vector.broadcast %31 : vector<16x1xf32> to vector<16x128xf32>
    %34 = vector.broadcast %32 : vector<1x128xf32> to vector<16x128xf32>
    %35 = arith.mulf %33, %34 : vector<16x128xf32>
    %36 = arith.addf %30, %35 : vector<16x128xf32>
    %37 = vector.broadcast %9 : vector<16x1xf32> to vector<16x128xf32>
    %38 = arith.addf %36, %37 : vector<16x128xf32>
    %c0_30 = arith.constant 0 : index
    %c0_31 = arith.constant 0 : index
    %c0_32 = arith.constant 0 : index
    %39 = vector.load %arg4[%c0_30, %c0_31, %c0_32] : memref<4x16x128xf32, #tpu.memory_space<vmem>>, vector<1x16x128xf32>
    %40 = vector.shape_cast %39 : vector<1x16x128xf32> to vector<16x128xf32>
    %c0_33 = arith.constant 0 : index
    %c0_34 = arith.constant 0 : index
    %c0_35 = arith.constant 0 : index
    %41 = vector.load %arg2[%c0_33, %c0_34, %c0_35] : memref<4x2x128xf32, #tpu.memory_space<vmem>>, vector<1x2x128xf32>
    %42 = vector.shape_cast %41 : vector<1x2x128xf32> to vector<2x128xf32>
    %cst_36 = arith.constant dense<0.000000e+00> : vector<32x128xf32>
    %43 = tpu.matmul %2, %40, %cst_36 {dimension_numbers = #tpu.dot_dimension_numbers<[1], [0], [0], [1], [0, 0, 1, 1], [], []>} : vector<32x16xf32>, vector<16x128xf32>, vector<32x128xf32> -> vector<32x128xf32>
    %44 = vector.broadcast %3 : vector<32x1xf32> to vector<32x128xf32>
    %45 = arith.addf %43, %44 : vector<32x128xf32>
    %46 = vector.extract_strided_slice %45 {offsets = [0, 0], sizes = [16, 128], strides = [1, 1]} : vector<32x128xf32> to vector<16x128xf32>
    %47 = arith.negf %46 : vector<16x128xf32>
    %48 = math.exp %47 : vector<16x128xf32>
    %cst_37 = arith.constant 1.000000e+00 : f32
    %49 = vector.broadcast %cst_37 : f32 to vector<16x128xf32>
    %50 = arith.addf %49, %48 : vector<16x128xf32>
    %51 = arith.divf %49, %50 : vector<16x128xf32>
    %52 = vector.extract_strided_slice %45 {offsets = [16, 0], sizes = [16, 128], strides = [1, 1]} : vector<32x128xf32> to vector<16x128xf32>
    %53 = arith.mulf %51, %52 : vector<16x128xf32>
    %54 = arith.addf %53, %25 : vector<16x128xf32>
    %55 = arith.addf %51, %23 : vector<16x128xf32>
    %56 = tpu.reciprocal %55 {approx = true} : vector<16x128xf32> -> vector<16x128xf32>
    %57 = arith.mulf %54, %56 : vector<16x128xf32>
    %58 = vector.extract_strided_slice %42 {offsets = [0, 0], sizes = [1, 128], strides = [1, 1]} : vector<2x128xf32> to vector<1x128xf32>
    %59 = vector.extract_strided_slice %0 {offsets = [0, 0], sizes = [1, 128], strides = [1, 1]} : vector<2x128xf32> to vector<1x128xf32>
    %60 = arith.subf %58, %59 : vector<1x128xf32>
    %61 = vector.extract_strided_slice %42 {offsets = [1, 0], sizes = [1, 128], strides = [1, 1]} : vector<2x128xf32> to vector<1x128xf32>
    %62 = vector.extract_strided_slice %0 {offsets = [1, 0], sizes = [1, 128], strides = [1, 1]} : vector<2x128xf32> to vector<1x128xf32>
    %63 = arith.subf %61, %62 : vector<1x128xf32>
    %64 = arith.mulf %60, %60 : vector<1x128xf32>
    %65 = arith.mulf %63, %63 : vector<1x128xf32>
    %66 = arith.addf %64, %65 : vector<1x128xf32>
    %cst_38 = arith.constant 9.99999968E-21 : f32
    %67 = vector.broadcast %cst_38 : f32 to vector<1x128xf32>
    %68 = arith.addf %66, %67 : vector<1x128xf32>
    %69 = math.sqrt %68 : vector<1x128xf32>
    %70 = vector.extract_strided_slice %7 {offsets = [0, 0], sizes = [16, 1], strides = [1, 1]} : vector<16x2xf32> to vector<16x1xf32>
    %71 = vector.extract_strided_slice %42 {offsets = [0, 0], sizes = [1, 128], strides = [1, 1]} : vector<2x128xf32> to vector<1x128xf32>
    %72 = vector.broadcast %70 : vector<16x1xf32> to vector<16x128xf32>
    %73 = vector.broadcast %71 : vector<1x128xf32> to vector<16x128xf32>
    %74 = arith.mulf %72, %73 : vector<16x128xf32>
    %75 = vector.extract_strided_slice %7 {offsets = [0, 1], sizes = [16, 1], strides = [1, 1]} : vector<16x2xf32> to vector<16x1xf32>
    %76 = vector.extract_strided_slice %42 {offsets = [1, 0], sizes = [1, 128], strides = [1, 1]} : vector<2x128xf32> to vector<1x128xf32>
    %77 = vector.broadcast %75 : vector<16x1xf32> to vector<16x128xf32>
    %78 = vector.broadcast %76 : vector<1x128xf32> to vector<16x128xf32>
    %79 = arith.mulf %77, %78 : vector<16x128xf32>
    %80 = arith.addf %74, %79 : vector<16x128xf32>
    %81 = arith.addf %38, %80 : vector<16x128xf32>
    %82 = vector.broadcast %8 : vector<16x1xf32> to vector<16x128xf32>
    %83 = vector.broadcast %69 : vector<1x128xf32> to vector<16x128xf32>
    %84 = arith.mulf %82, %83 : vector<16x128xf32>
    %85 = arith.addf %81, %84 : vector<16x128xf32>
    %cst_39 = arith.constant 0.000000e+00 : f32
    %86 = vector.broadcast %cst_39 : f32 to vector<16x128xf32>
    %87 = arith.maximumf %85, %86 : vector<16x128xf32>
    %cst_40 = arith.constant dense<0.000000e+00> : vector<16x128xf32>
    %88 = tpu.matmul %10, %87, %cst_40 {dimension_numbers = #tpu.dot_dimension_numbers<[1], [0], [0], [1], [0, 0, 1, 1], [], []>} : vector<16x16xf32>, vector<16x128xf32>, vector<16x128xf32> -> vector<16x128xf32>
    %cst_41 = arith.constant dense<0.000000e+00> : vector<16x128xf32>
    %89 = tpu.matmul %11, %57, %cst_41 {dimension_numbers = #tpu.dot_dimension_numbers<[1], [0], [0], [1], [0, 0, 1, 1], [], []>} : vector<16x16xf32>, vector<16x128xf32>, vector<16x128xf32> -> vector<16x128xf32>
    %90 = arith.addf %88, %89 : vector<16x128xf32>
    %91 = vector.broadcast %12 : vector<16x1xf32> to vector<16x128xf32>
    %92 = arith.addf %90, %91 : vector<16x128xf32>
    %cst_42 = arith.constant 0.000000e+00 : f32
    %93 = vector.broadcast %cst_42 : f32 to vector<16x128xf32>
    %94 = arith.maximumf %92, %93 : vector<16x128xf32>
    %cst_43 = arith.constant dense<0.000000e+00> : vector<16x128xf32>
    %95 = tpu.matmul %13, %94, %cst_43 {dimension_numbers = #tpu.dot_dimension_numbers<[1], [0], [0], [1], [0, 0, 1, 1], [], []>} : vector<16x16xf32>, vector<16x128xf32>, vector<16x128xf32> -> vector<16x128xf32>
    %96 = vector.broadcast %14 : vector<16x1xf32> to vector<16x128xf32>
    %97 = arith.addf %95, %96 : vector<16x128xf32>
    %cst_44 = arith.constant 0.000000e+00 : f32
    %98 = vector.broadcast %cst_44 : f32 to vector<16x128xf32>
    %99 = arith.maximumf %97, %98 : vector<16x128xf32>
    %cst_45 = arith.constant 1.000000e+00 : f32
    %100 = vector.broadcast %cst_45 : f32 to vector<16x128xf32>
    %c1 = arith.constant 1 : index
    %c0_46 = arith.constant 0 : index
    %c0_47 = arith.constant 0 : index
    %101 = vector.load %arg4[%c1, %c0_46, %c0_47] : memref<4x16x128xf32, #tpu.memory_space<vmem>>, vector<1x16x128xf32>
    %102 = vector.shape_cast %101 : vector<1x16x128xf32> to vector<16x128xf32>
    %c1_48 = arith.constant 1 : index
    %c0_49 = arith.constant 0 : index
    %c0_50 = arith.constant 0 : index
    %103 = vector.load %arg2[%c1_48, %c0_49, %c0_50] : memref<4x2x128xf32, #tpu.memory_space<vmem>>, vector<1x2x128xf32>
    %104 = vector.shape_cast %103 : vector<1x2x128xf32> to vector<2x128xf32>
    %cst_51 = arith.constant dense<0.000000e+00> : vector<32x128xf32>
    %105 = tpu.matmul %2, %102, %cst_51 {dimension_numbers = #tpu.dot_dimension_numbers<[1], [0], [0], [1], [0, 0, 1, 1], [], []>} : vector<32x16xf32>, vector<16x128xf32>, vector<32x128xf32> -> vector<32x128xf32>
    %106 = vector.broadcast %3 : vector<32x1xf32> to vector<32x128xf32>
    %107 = arith.addf %105, %106 : vector<32x128xf32>
    %108 = vector.extract_strided_slice %107 {offsets = [0, 0], sizes = [16, 128], strides = [1, 1]} : vector<32x128xf32> to vector<16x128xf32>
    %109 = arith.negf %108 : vector<16x128xf32>
    %110 = math.exp %109 : vector<16x128xf32>
    %cst_52 = arith.constant 1.000000e+00 : f32
    %111 = vector.broadcast %cst_52 : f32 to vector<16x128xf32>
    %112 = arith.addf %111, %110 : vector<16x128xf32>
    %113 = arith.divf %111, %112 : vector<16x128xf32>
    %114 = vector.extract_strided_slice %107 {offsets = [16, 0], sizes = [16, 128], strides = [1, 1]} : vector<32x128xf32> to vector<16x128xf32>
    %115 = arith.mulf %113, %114 : vector<16x128xf32>
    %116 = arith.addf %115, %25 : vector<16x128xf32>
    %117 = arith.addf %113, %23 : vector<16x128xf32>
    %118 = tpu.reciprocal %117 {approx = true} : vector<16x128xf32> -> vector<16x128xf32>
    %119 = arith.mulf %116, %118 : vector<16x128xf32>
    %120 = vector.extract_strided_slice %104 {offsets = [0, 0], sizes = [1, 128], strides = [1, 1]} : vector<2x128xf32> to vector<1x128xf32>
    %121 = vector.extract_strided_slice %0 {offsets = [0, 0], sizes = [1, 128], strides = [1, 1]} : vector<2x128xf32> to vector<1x128xf32>
    %122 = arith.subf %120, %121 : vector<1x128xf32>
    %123 = vector.extract_strided_slice %104 {offsets = [1, 0], sizes = [1, 128], strides = [1, 1]} : vector<2x128xf32> to vector<1x128xf32>
    %124 = vector.extract_strided_slice %0 {offsets = [1, 0], sizes = [1, 128], strides = [1, 1]} : vector<2x128xf32> to vector<1x128xf32>
    %125 = arith.subf %123, %124 : vector<1x128xf32>
    %126 = arith.mulf %122, %122 : vector<1x128xf32>
    %127 = arith.mulf %125, %125 : vector<1x128xf32>
    %128 = arith.addf %126, %127 : vector<1x128xf32>
    %cst_53 = arith.constant 9.99999968E-21 : f32
    %129 = vector.broadcast %cst_53 : f32 to vector<1x128xf32>
    %130 = arith.addf %128, %129 : vector<1x128xf32>
    %131 = math.sqrt %130 : vector<1x128xf32>
    %132 = vector.extract_strided_slice %7 {offsets = [0, 0], sizes = [16, 1], strides = [1, 1]} : vector<16x2xf32> to vector<16x1xf32>
    %133 = vector.extract_strided_slice %104 {offsets = [0, 0], sizes = [1, 128], strides = [1, 1]} : vector<2x128xf32> to vector<1x128xf32>
    %134 = vector.broadcast %132 : vector<16x1xf32> to vector<16x128xf32>
    %135 = vector.broadcast %133 : vector<1x128xf32> to vector<16x128xf32>
    %136 = arith.mulf %134, %135 : vector<16x128xf32>
    %137 = vector.extract_strided_slice %7 {offsets = [0, 1], sizes = [16, 1], strides = [1, 1]} : vector<16x2xf32> to vector<16x1xf32>
    %138 = vector.extract_strided_slice %104 {offsets = [1, 0], sizes = [1, 128], strides = [1, 1]} : vector<2x128xf32> to vector<1x128xf32>
    %139 = vector.broadcast %137 : vector<16x1xf32> to vector<16x128xf32>
    %140 = vector.broadcast %138 : vector<1x128xf32> to vector<16x128xf32>
    %141 = arith.mulf %139, %140 : vector<16x128xf32>
    %142 = arith.addf %136, %141 : vector<16x128xf32>
    %143 = arith.addf %38, %142 : vector<16x128xf32>
    %144 = vector.broadcast %8 : vector<16x1xf32> to vector<16x128xf32>
    %145 = vector.broadcast %131 : vector<1x128xf32> to vector<16x128xf32>
    %146 = arith.mulf %144, %145 : vector<16x128xf32>
    %147 = arith.addf %143, %146 : vector<16x128xf32>
    %cst_54 = arith.constant 0.000000e+00 : f32
    %148 = vector.broadcast %cst_54 : f32 to vector<16x128xf32>
    %149 = arith.maximumf %147, %148 : vector<16x128xf32>
    %cst_55 = arith.constant dense<0.000000e+00> : vector<16x128xf32>
    %150 = tpu.matmul %10, %149, %cst_55 {dimension_numbers = #tpu.dot_dimension_numbers<[1], [0], [0], [1], [0, 0, 1, 1], [], []>} : vector<16x16xf32>, vector<16x128xf32>, vector<16x128xf32> -> vector<16x128xf32>
    %cst_56 = arith.constant dense<0.000000e+00> : vector<16x128xf32>
    %151 = tpu.matmul %11, %119, %cst_56 {dimension_numbers = #tpu.dot_dimension_numbers<[1], [0], [0], [1], [0, 0, 1, 1], [], []>} : vector<16x16xf32>, vector<16x128xf32>, vector<16x128xf32> -> vector<16x128xf32>
    %152 = arith.addf %150, %151 : vector<16x128xf32>
    %153 = vector.broadcast %12 : vector<16x1xf32> to vector<16x128xf32>
    %154 = arith.addf %152, %153 : vector<16x128xf32>
    %cst_57 = arith.constant 0.000000e+00 : f32
    %155 = vector.broadcast %cst_57 : f32 to vector<16x128xf32>
    %156 = arith.maximumf %154, %155 : vector<16x128xf32>
    %cst_58 = arith.constant dense<0.000000e+00> : vector<16x128xf32>
    %157 = tpu.matmul %13, %156, %cst_58 {dimension_numbers = #tpu.dot_dimension_numbers<[1], [0], [0], [1], [0, 0, 1, 1], [], []>} : vector<16x16xf32>, vector<16x128xf32>, vector<16x128xf32> -> vector<16x128xf32>
    %158 = vector.broadcast %14 : vector<16x1xf32> to vector<16x128xf32>
    %159 = arith.addf %157, %158 : vector<16x128xf32>
    %cst_59 = arith.constant 0.000000e+00 : f32
    %160 = vector.broadcast %cst_59 : f32 to vector<16x128xf32>
    %161 = arith.maximumf %159, %160 : vector<16x128xf32>
    %162 = arith.maximumf %99, %161 : vector<16x128xf32>
    %163 = arith.subf %99, %162 : vector<16x128xf32>
    %164 = math.exp %163 : vector<16x128xf32>
    %165 = arith.subf %161, %162 : vector<16x128xf32>
    %166 = math.exp %165 : vector<16x128xf32>
    %167 = arith.mulf %164, %100 : vector<16x128xf32>
    %168 = arith.addf %167, %166 : vector<16x128xf32>
    %169 = arith.mulf %164, %57 : vector<16x128xf32>
    %170 = arith.mulf %166, %119 : vector<16x128xf32>
    %171 = arith.addf %169, %170 : vector<16x128xf32>
    %c2 = arith.constant 2 : index
    %c0_60 = arith.constant 0 : index
    %c0_61 = arith.constant 0 : index
    %172 = vector.load %arg4[%c2, %c0_60, %c0_61] : memref<4x16x128xf32, #tpu.memory_space<vmem>>, vector<1x16x128xf32>
    %173 = vector.shape_cast %172 : vector<1x16x128xf32> to vector<16x128xf32>
    %c2_62 = arith.constant 2 : index
    %c0_63 = arith.constant 0 : index
    %c0_64 = arith.constant 0 : index
    %174 = vector.load %arg2[%c2_62, %c0_63, %c0_64] : memref<4x2x128xf32, #tpu.memory_space<vmem>>, vector<1x2x128xf32>
    %175 = vector.shape_cast %174 : vector<1x2x128xf32> to vector<2x128xf32>
    %cst_65 = arith.constant dense<0.000000e+00> : vector<32x128xf32>
    %176 = tpu.matmul %2, %173, %cst_65 {dimension_numbers = #tpu.dot_dimension_numbers<[1], [0], [0], [1], [0, 0, 1, 1], [], []>} : vector<32x16xf32>, vector<16x128xf32>, vector<32x128xf32> -> vector<32x128xf32>
    %177 = vector.broadcast %3 : vector<32x1xf32> to vector<32x128xf32>
    %178 = arith.addf %176, %177 : vector<32x128xf32>
    %179 = vector.extract_strided_slice %178 {offsets = [0, 0], sizes = [16, 128], strides = [1, 1]} : vector<32x128xf32> to vector<16x128xf32>
    %180 = arith.negf %179 : vector<16x128xf32>
    %181 = math.exp %180 : vector<16x128xf32>
    %cst_66 = arith.constant 1.000000e+00 : f32
    %182 = vector.broadcast %cst_66 : f32 to vector<16x128xf32>
    %183 = arith.addf %182, %181 : vector<16x128xf32>
    %184 = arith.divf %182, %183 : vector<16x128xf32>
    %185 = vector.extract_strided_slice %178 {offsets = [16, 0], sizes = [16, 128], strides = [1, 1]} : vector<32x128xf32> to vector<16x128xf32>
    %186 = arith.mulf %184, %185 : vector<16x128xf32>
    %187 = arith.addf %186, %25 : vector<16x128xf32>
    %188 = arith.addf %184, %23 : vector<16x128xf32>
    %189 = tpu.reciprocal %188 {approx = true} : vector<16x128xf32> -> vector<16x128xf32>
    %190 = arith.mulf %187, %189 : vector<16x128xf32>
    %191 = vector.extract_strided_slice %175 {offsets = [0, 0], sizes = [1, 128], strides = [1, 1]} : vector<2x128xf32> to vector<1x128xf32>
    %192 = vector.extract_strided_slice %0 {offsets = [0, 0], sizes = [1, 128], strides = [1, 1]} : vector<2x128xf32> to vector<1x128xf32>
    %193 = arith.subf %191, %192 : vector<1x128xf32>
    %194 = vector.extract_strided_slice %175 {offsets = [1, 0], sizes = [1, 128], strides = [1, 1]} : vector<2x128xf32> to vector<1x128xf32>
    %195 = vector.extract_strided_slice %0 {offsets = [1, 0], sizes = [1, 128], strides = [1, 1]} : vector<2x128xf32> to vector<1x128xf32>
    %196 = arith.subf %194, %195 : vector<1x128xf32>
    %197 = arith.mulf %193, %193 : vector<1x128xf32>
    %198 = arith.mulf %196, %196 : vector<1x128xf32>
    %199 = arith.addf %197, %198 : vector<1x128xf32>
    %cst_67 = arith.constant 9.99999968E-21 : f32
    %200 = vector.broadcast %cst_67 : f32 to vector<1x128xf32>
    %201 = arith.addf %199, %200 : vector<1x128xf32>
    %202 = math.sqrt %201 : vector<1x128xf32>
    %203 = vector.extract_strided_slice %7 {offsets = [0, 0], sizes = [16, 1], strides = [1, 1]} : vector<16x2xf32> to vector<16x1xf32>
    %204 = vector.extract_strided_slice %175 {offsets = [0, 0], sizes = [1, 128], strides = [1, 1]} : vector<2x128xf32> to vector<1x128xf32>
    %205 = vector.broadcast %203 : vector<16x1xf32> to vector<16x128xf32>
    %206 = vector.broadcast %204 : vector<1x128xf32> to vector<16x128xf32>
    %207 = arith.mulf %205, %206 : vector<16x128xf32>
    %208 = vector.extract_strided_slice %7 {offsets = [0, 1], sizes = [16, 1], strides = [1, 1]} : vector<16x2xf32> to vector<16x1xf32>
    %209 = vector.extract_strided_slice %175 {offsets = [1, 0], sizes = [1, 128], strides = [1, 1]} : vector<2x128xf32> to vector<1x128xf32>
    %210 = vector.broadcast %208 : vector<16x1xf32> to vector<16x128xf32>
    %211 = vector.broadcast %209 : vector<1x128xf32> to vector<16x128xf32>
    %212 = arith.mulf %210, %211 : vector<16x128xf32>
    %213 = arith.addf %207, %212 : vector<16x128xf32>
    %214 = arith.addf %38, %213 : vector<16x128xf32>
    %215 = vector.broadcast %8 : vector<16x1xf32> to vector<16x128xf32>
    %216 = vector.broadcast %202 : vector<1x128xf32> to vector<16x128xf32>
    %217 = arith.mulf %215, %216 : vector<16x128xf32>
    %218 = arith.addf %214, %217 : vector<16x128xf32>
    %cst_68 = arith.constant 0.000000e+00 : f32
    %219 = vector.broadcast %cst_68 : f32 to vector<16x128xf32>
    %220 = arith.maximumf %218, %219 : vector<16x128xf32>
    %cst_69 = arith.constant dense<0.000000e+00> : vector<16x128xf32>
    %221 = tpu.matmul %10, %220, %cst_69 {dimension_numbers = #tpu.dot_dimension_numbers<[1], [0], [0], [1], [0, 0, 1, 1], [], []>} : vector<16x16xf32>, vector<16x128xf32>, vector<16x128xf32> -> vector<16x128xf32>
    %cst_70 = arith.constant dense<0.000000e+00> : vector<16x128xf32>
    %222 = tpu.matmul %11, %190, %cst_70 {dimension_numbers = #tpu.dot_dimension_numbers<[1], [0], [0], [1], [0, 0, 1, 1], [], []>} : vector<16x16xf32>, vector<16x128xf32>, vector<16x128xf32> -> vector<16x128xf32>
    %223 = arith.addf %221, %222 : vector<16x128xf32>
    %224 = vector.broadcast %12 : vector<16x1xf32> to vector<16x128xf32>
    %225 = arith.addf %223, %224 : vector<16x128xf32>
    %cst_71 = arith.constant 0.000000e+00 : f32
    %226 = vector.broadcast %cst_71 : f32 to vector<16x128xf32>
    %227 = arith.maximumf %225, %226 : vector<16x128xf32>
    %cst_72 = arith.constant dense<0.000000e+00> : vector<16x128xf32>
    %228 = tpu.matmul %13, %227, %cst_72 {dimension_numbers = #tpu.dot_dimension_numbers<[1], [0], [0], [1], [0, 0, 1, 1], [], []>} : vector<16x16xf32>, vector<16x128xf32>, vector<16x128xf32> -> vector<16x128xf32>
    %229 = vector.broadcast %14 : vector<16x1xf32> to vector<16x128xf32>
    %230 = arith.addf %228, %229 : vector<16x128xf32>
    %cst_73 = arith.constant 0.000000e+00 : f32
    %231 = vector.broadcast %cst_73 : f32 to vector<16x128xf32>
    %232 = arith.maximumf %230, %231 : vector<16x128xf32>
    %233 = arith.maximumf %162, %232 : vector<16x128xf32>
    %234 = arith.subf %162, %233 : vector<16x128xf32>
    %235 = math.exp %234 : vector<16x128xf32>
    %236 = arith.subf %232, %233 : vector<16x128xf32>
    %237 = math.exp %236 : vector<16x128xf32>
    %238 = arith.mulf %235, %168 : vector<16x128xf32>
    %239 = arith.addf %238, %237 : vector<16x128xf32>
    %240 = arith.mulf %235, %171 : vector<16x128xf32>
    %241 = arith.mulf %237, %190 : vector<16x128xf32>
    %242 = arith.addf %240, %241 : vector<16x128xf32>
    %c3 = arith.constant 3 : index
    %c0_74 = arith.constant 0 : index
    %c0_75 = arith.constant 0 : index
    %243 = vector.load %arg4[%c3, %c0_74, %c0_75] : memref<4x16x128xf32, #tpu.memory_space<vmem>>, vector<1x16x128xf32>
    %244 = vector.shape_cast %243 : vector<1x16x128xf32> to vector<16x128xf32>
    %c3_76 = arith.constant 3 : index
    %c0_77 = arith.constant 0 : index
    %c0_78 = arith.constant 0 : index
    %245 = vector.load %arg2[%c3_76, %c0_77, %c0_78] : memref<4x2x128xf32, #tpu.memory_space<vmem>>, vector<1x2x128xf32>
    %246 = vector.shape_cast %245 : vector<1x2x128xf32> to vector<2x128xf32>
    %cst_79 = arith.constant dense<0.000000e+00> : vector<32x128xf32>
    %247 = tpu.matmul %2, %244, %cst_79 {dimension_numbers = #tpu.dot_dimension_numbers<[1], [0], [0], [1], [0, 0, 1, 1], [], []>} : vector<32x16xf32>, vector<16x128xf32>, vector<32x128xf32> -> vector<32x128xf32>
    %248 = vector.broadcast %3 : vector<32x1xf32> to vector<32x128xf32>
    %249 = arith.addf %247, %248 : vector<32x128xf32>
    %250 = vector.extract_strided_slice %249 {offsets = [0, 0], sizes = [16, 128], strides = [1, 1]} : vector<32x128xf32> to vector<16x128xf32>
    %251 = arith.negf %250 : vector<16x128xf32>
    %252 = math.exp %251 : vector<16x128xf32>
    %cst_80 = arith.constant 1.000000e+00 : f32
    %253 = vector.broadcast %cst_80 : f32 to vector<16x128xf32>
    %254 = arith.addf %253, %252 : vector<16x128xf32>
    %255 = arith.divf %253, %254 : vector<16x128xf32>
    %256 = vector.extract_strided_slice %249 {offsets = [16, 0], sizes = [16, 128], strides = [1, 1]} : vector<32x128xf32> to vector<16x128xf32>
    %257 = arith.mulf %255, %256 : vector<16x128xf32>
    %258 = arith.addf %257, %25 : vector<16x128xf32>
    %259 = arith.addf %255, %23 : vector<16x128xf32>
    %260 = tpu.reciprocal %259 {approx = true} : vector<16x128xf32> -> vector<16x128xf32>
    %261 = arith.mulf %258, %260 : vector<16x128xf32>
    %262 = vector.extract_strided_slice %246 {offsets = [0, 0], sizes = [1, 128], strides = [1, 1]} : vector<2x128xf32> to vector<1x128xf32>
    %263 = vector.extract_strided_slice %0 {offsets = [0, 0], sizes = [1, 128], strides = [1, 1]} : vector<2x128xf32> to vector<1x128xf32>
    %264 = arith.subf %262, %263 : vector<1x128xf32>
    %265 = vector.extract_strided_slice %246 {offsets = [1, 0], sizes = [1, 128], strides = [1, 1]} : vector<2x128xf32> to vector<1x128xf32>
    %266 = vector.extract_strided_slice %0 {offsets = [1, 0], sizes = [1, 128], strides = [1, 1]} : vector<2x128xf32> to vector<1x128xf32>
    %267 = arith.subf %265, %266 : vector<1x128xf32>
    %268 = arith.mulf %264, %264 : vector<1x128xf32>
    %269 = arith.mulf %267, %267 : vector<1x128xf32>
    %270 = arith.addf %268, %269 : vector<1x128xf32>
    %cst_81 = arith.constant 9.99999968E-21 : f32
    %271 = vector.broadcast %cst_81 : f32 to vector<1x128xf32>
    %272 = arith.addf %270, %271 : vector<1x128xf32>
    %273 = math.sqrt %272 : vector<1x128xf32>
    %274 = vector.extract_strided_slice %7 {offsets = [0, 0], sizes = [16, 1], strides = [1, 1]} : vector<16x2xf32> to vector<16x1xf32>
    %275 = vector.extract_strided_slice %246 {offsets = [0, 0], sizes = [1, 128], strides = [1, 1]} : vector<2x128xf32> to vector<1x128xf32>
    %276 = vector.broadcast %274 : vector<16x1xf32> to vector<16x128xf32>
    %277 = vector.broadcast %275 : vector<1x128xf32> to vector<16x128xf32>
    %278 = arith.mulf %276, %277 : vector<16x128xf32>
    %279 = vector.extract_strided_slice %7 {offsets = [0, 1], sizes = [16, 1], strides = [1, 1]} : vector<16x2xf32> to vector<16x1xf32>
    %280 = vector.extract_strided_slice %246 {offsets = [1, 0], sizes = [1, 128], strides = [1, 1]} : vector<2x128xf32> to vector<1x128xf32>
    %281 = vector.broadcast %279 : vector<16x1xf32> to vector<16x128xf32>
    %282 = vector.broadcast %280 : vector<1x128xf32> to vector<16x128xf32>
    %283 = arith.mulf %281, %282 : vector<16x128xf32>
    %284 = arith.addf %278, %283 : vector<16x128xf32>
    %285 = arith.addf %38, %284 : vector<16x128xf32>
    %286 = vector.broadcast %8 : vector<16x1xf32> to vector<16x128xf32>
    %287 = vector.broadcast %273 : vector<1x128xf32> to vector<16x128xf32>
    %288 = arith.mulf %286, %287 : vector<16x128xf32>
    %289 = arith.addf %285, %288 : vector<16x128xf32>
    %cst_82 = arith.constant 0.000000e+00 : f32
    %290 = vector.broadcast %cst_82 : f32 to vector<16x128xf32>
    %291 = arith.maximumf %289, %290 : vector<16x128xf32>
    %cst_83 = arith.constant dense<0.000000e+00> : vector<16x128xf32>
    %292 = tpu.matmul %10, %291, %cst_83 {dimension_numbers = #tpu.dot_dimension_numbers<[1], [0], [0], [1], [0, 0, 1, 1], [], []>} : vector<16x16xf32>, vector<16x128xf32>, vector<16x128xf32> -> vector<16x128xf32>
    %cst_84 = arith.constant dense<0.000000e+00> : vector<16x128xf32>
    %293 = tpu.matmul %11, %261, %cst_84 {dimension_numbers = #tpu.dot_dimension_numbers<[1], [0], [0], [1], [0, 0, 1, 1], [], []>} : vector<16x16xf32>, vector<16x128xf32>, vector<16x128xf32> -> vector<16x128xf32>
    %294 = arith.addf %292, %293 : vector<16x128xf32>
    %295 = vector.broadcast %12 : vector<16x1xf32> to vector<16x128xf32>
    %296 = arith.addf %294, %295 : vector<16x128xf32>
    %cst_85 = arith.constant 0.000000e+00 : f32
    %297 = vector.broadcast %cst_85 : f32 to vector<16x128xf32>
    %298 = arith.maximumf %296, %297 : vector<16x128xf32>
    %cst_86 = arith.constant dense<0.000000e+00> : vector<16x128xf32>
    %299 = tpu.matmul %13, %298, %cst_86 {dimension_numbers = #tpu.dot_dimension_numbers<[1], [0], [0], [1], [0, 0, 1, 1], [], []>} : vector<16x16xf32>, vector<16x128xf32>, vector<16x128xf32> -> vector<16x128xf32>
    %300 = vector.broadcast %14 : vector<16x1xf32> to vector<16x128xf32>
    %301 = arith.addf %299, %300 : vector<16x128xf32>
    %cst_87 = arith.constant 0.000000e+00 : f32
    %302 = vector.broadcast %cst_87 : f32 to vector<16x128xf32>
    %303 = arith.maximumf %301, %302 : vector<16x128xf32>
    %304 = arith.maximumf %233, %303 : vector<16x128xf32>
    %305 = arith.subf %233, %304 : vector<16x128xf32>
    %306 = math.exp %305 : vector<16x128xf32>
    %307 = arith.subf %303, %304 : vector<16x128xf32>
    %308 = math.exp %307 : vector<16x128xf32>
    %309 = arith.mulf %306, %239 : vector<16x128xf32>
    %310 = arith.addf %309, %308 : vector<16x128xf32>
    %311 = arith.mulf %306, %242 : vector<16x128xf32>
    %312 = arith.mulf %308, %261 : vector<16x128xf32>
    %313 = arith.addf %311, %312 : vector<16x128xf32>
    %314 = tpu.reciprocal %310 {approx = true} : vector<16x128xf32> -> vector<16x128xf32>
    %315 = arith.mulf %313, %314 : vector<16x128xf32>
    %c0_88 = arith.constant 0 : index
    %c0_89 = arith.constant 0 : index
    %316 = vector.load %arg18[%c0_88, %c0_89] : memref<16x128xf32, #tpu.memory_space<vmem>>, vector<16x128xf32>
    tpu.vector_store %arg18[%c0_88, %c0_89], %315 {strides = array<i32>} : memref<16x128xf32, #tpu.memory_space<vmem>>, vector<16x128xf32>,
    return
  }
  func.func @transform_0(%arg0: i32) -> (i32, i32) {
    %c0_i32 = arith.constant 0 : i32
    %c0_i32_0 = arith.constant 0 : i32
    return %c0_i32, %arg0 : i32, i32
  }
  func.func @transform_1(%arg0: i32) -> (i32, i32, i32) {
    %c0_i32 = arith.constant 0 : i32
    %c0_i32_0 = arith.constant 0 : i32
    %c0_i32_1 = arith.constant 0 : i32
    return %c0_i32, %c0_i32_0, %arg0 : i32, i32, i32
  }
  func.func @transform_2(%arg0: i32) -> (i32, i32) {
    %c0_i32 = arith.constant 0 : i32
    %c0_i32_0 = arith.constant 0 : i32
    return %c0_i32, %arg0 : i32, i32
  }
  func.func @transform_3(%arg0: i32) -> (i32, i32, i32) {
    %c0_i32 = arith.constant 0 : i32
    %c0_i32_0 = arith.constant 0 : i32
    %c0_i32_1 = arith.constant 0 : i32
    return %c0_i32, %c0_i32_0, %arg0 : i32, i32, i32
  }
  func.func @transform_4(%arg0: i32) -> (i32, i32) {
    %c0_i32 = arith.constant 0 : i32
    %c0_i32_0 = arith.constant 0 : i32
    %c0_i32_1 = arith.constant 0 : i32
    return %c0_i32, %c0_i32_0 : i32, i32
  }
  func.func @transform_5(%arg0: i32) -> (i32, i32) {
    %c0_i32 = arith.constant 0 : i32
    %c0_i32_0 = arith.constant 0 : i32
    %c0_i32_1 = arith.constant 0 : i32
    return %c0_i32, %c0_i32_0 : i32, i32
  }
  func.func @transform_6(%arg0: i32) -> (i32, i32) {
    %c0_i32 = arith.constant 0 : i32
    %c0_i32_0 = arith.constant 0 : i32
    %c0_i32_1 = arith.constant 0 : i32
    return %c0_i32, %c0_i32_0 : i32, i32
  }
  func.func @transform_7(%arg0: i32) -> (i32, i32) {
    %c0_i32 = arith.constant 0 : i32
    %c0_i32_0 = arith.constant 0 : i32
    %c0_i32_1 = arith.constant 0 : i32
    return %c0_i32, %c0_i32_0 : i32, i32
  }
  func.func @transform_8(%arg0: i32) -> (i32, i32) {
    %c0_i32 = arith.constant 0 : i32
    %c0_i32_0 = arith.constant 0 : i32
    %c0_i32_1 = arith.constant 0 : i32
    return %c0_i32, %c0_i32_0 : i32, i32
  }
  func.func @transform_9(%arg0: i32) -> (i32, i32) {
    %c0_i32 = arith.constant 0 : i32
    %c0_i32_0 = arith.constant 0 : i32
    %c0_i32_1 = arith.constant 0 : i32
    return %c0_i32, %c0_i32_0 : i32, i32
  }
  func.func @transform_10(%arg0: i32) -> (i32, i32) {
    %c0_i32 = arith.constant 0 : i32
    %c0_i32_0 = arith.constant 0 : i32
    %c0_i32_1 = arith.constant 0 : i32
    return %c0_i32, %c0_i32_0 : i32, i32
  }
  func.func @transform_11(%arg0: i32) -> (i32, i32) {
    %c0_i32 = arith.constant 0 : i32
    %c0_i32_0 = arith.constant 0 : i32
    %c0_i32_1 = arith.constant 0 : i32
    return %c0_i32, %c0_i32_0 : i32, i32
  }
  func.func @transform_12(%arg0: i32) -> (i32, i32) {
    %c0_i32 = arith.constant 0 : i32
    %c0_i32_0 = arith.constant 0 : i32
    %c0_i32_1 = arith.constant 0 : i32
    return %c0_i32, %c0_i32_0 : i32, i32
  }
  func.func @transform_13(%arg0: i32) -> (i32, i32) {
    %c0_i32 = arith.constant 0 : i32
    %c0_i32_0 = arith.constant 0 : i32
    %c0_i32_1 = arith.constant 0 : i32
    return %c0_i32, %c0_i32_0 : i32, i32
  }
  func.func @transform_14(%arg0: i32) -> (i32, i32) {
    %c0_i32 = arith.constant 0 : i32
    %c0_i32_0 = arith.constant 0 : i32
    %c0_i32_1 = arith.constant 0 : i32
    return %c0_i32, %c0_i32_0 : i32, i32
  }
  func.func @transform_15(%arg0: i32) -> (i32, i32) {
    %c0_i32 = arith.constant 0 : i32
    %c0_i32_0 = arith.constant 0 : i32
    %c0_i32_1 = arith.constant 0 : i32
    return %c0_i32, %c0_i32_0 : i32, i32
  }
  func.func @transform_16(%arg0: i32) -> (i32, i32) {
    %c0_i32 = arith.constant 0 : i32
    %c0_i32_0 = arith.constant 0 : i32
    %c0_i32_1 = arith.constant 0 : i32
    return %c0_i32, %c0_i32_0 : i32, i32
  }
  func.func @transform_17(%arg0: i32) -> (i32, i32) {
    %c0_i32 = arith.constant 0 : i32
    %c0_i32_0 = arith.constant 0 : i32
    return %c0_i32, %arg0 : i32, i32
  }
}

</mosaic_0001>

<llo_original>
// kernel: tpu_custom_call.1
$region0: #{tpu_custom_call.1}
  #allocation0 [shape = 'u32[]', space=smem, size = 0x4, offset = 0x4, fixed_abs, tag = 'smem constant byte address 0x4 - core index']
  #allocation1 [shape = 'u32[144,128]{1,0:T(1,128)}', space=vmem, size = 0x12000, scoped, tag = 'internal scratch']
  %s0 = inlined_call_operand.vmem [shape: f32[2,128], index: 0, kind: input, shape index: {}]
  %s1 = inlined_call_operand.vmem [shape: f32[4,2,128], index: 1, kind: input, shape index: {}]
  %s2 = inlined_call_operand.vmem [shape: f32[16,128], index: 2, kind: input, shape index: {}]
  %s3 = inlined_call_operand.vmem [shape: f32[4,16,128], index: 3, kind: input, shape index: {}]
  %s4 = inlined_call_operand.vmem [shape: f32[32,16], index: 4, kind: input, shape index: {}]
  %s5 = inlined_call_operand.vmem [shape: f32[32,1], index: 5, kind: input, shape index: {}]
  %s6 = inlined_call_operand.vmem [shape: f32[32,16], index: 6, kind: input, shape index: {}]
  %s7 = inlined_call_operand.vmem [shape: f32[32,1], index: 7, kind: input, shape index: {}]
  %s8 = inlined_call_operand.vmem [shape: f32[16,2], index: 8, kind: input, shape index: {}]
  %s9 = inlined_call_operand.vmem [shape: f32[16,2], index: 9, kind: input, shape index: {}]
  %s10 = inlined_call_operand.vmem [shape: f32[16,1], index: 10, kind: input, shape index: {}]
  %s11 = inlined_call_operand.vmem [shape: f32[16,1], index: 11, kind: input, shape index: {}]
  %s12 = inlined_call_operand.vmem [shape: f32[16,16], index: 12, kind: input, shape index: {}]
  %s13 = inlined_call_operand.vmem [shape: f32[16,16], index: 13, kind: input, shape index: {}]
  %s14 = inlined_call_operand.vmem [shape: f32[16,1], index: 14, kind: input, shape index: {}]
  %s15 = inlined_call_operand.vmem [shape: f32[16,16], index: 15, kind: input, shape index: {}]
  %s16 = inlined_call_operand.vmem [shape: f32[16,1], index: 16, kind: input, shape index: {}]
  %s17 = inlined_call_operand.hbm [shape: f32[16,128], index: 17, kind: output, shape index: {}]
  %s18 = sld [smem:[#allocation0]]
  $region78: #{tpu_custom_call.1} parent=0
    _
  %s20 = ssub.s32 1, %s18
  %s21 = scalar_select 0, %s20, %s18
  $region1: #{tpu_custom_call.1} parent=0
    #allocation2 [shape = 'u8[8192]{0}', space=vmem, size = 0x2000, scoped, tag = 'output window, operand 0, single buffered']
    #allocation3 [shape = 's32[1]{0}', space=sflag, size = 0x4, scoped, tag = 'scoped memory for tpu_custom_call.1']
    %22 = vsyncpa [#allocation3], 0
    // Predicated region
    $region2: #{tpu_custom_call.1} parent=1 // pred_check
      _
    $region3: #{tpu_custom_call.1} parent=1 // pred_check_branch
      %24 = sbr.rel (0) target = $region5
    $region4: #{tpu_custom_call.1} parent=1 // pred_region
      _
    $region5: #{tpu_custom_call.1} parent=1 // pred_fallthru
      _
    // Predicated region
    $region6: #{tpu_custom_call.1} parent=1 // pred_check
      _
    $region7: #{tpu_custom_call.1} parent=1 // pred_check_branch
      %26 = sbr.rel (0) target = $region9
    $region8: #{tpu_custom_call.1} parent=1 // pred_region
      _
    $region9: #{tpu_custom_call.1} parent=1 // pred_fallthru
      _
    // Predicated region
    $region10: #{tpu_custom_call.1} parent=1 // pred_check
      _
    $region11: #{tpu_custom_call.1} parent=1 // pred_check_branch
      %28 = sbr.rel (0) target = $region13
    $region12: #{tpu_custom_call.1} parent=1 // pred_region
      _
    $region13: #{tpu_custom_call.1} parent=1 // pred_fallthru
      _
    // Predicated region
    $region14: #{tpu_custom_call.1} parent=1 // pred_check
      _
    $region15: #{tpu_custom_call.1} parent=1 // pred_check_branch
      %30 = sbr.rel (0) target = $region17
    $region16: #{tpu_custom_call.1} parent=1 // pred_region
      _
    $region17: #{tpu_custom_call.1} parent=1 // pred_fallthru
      _
    // Predicated region
    $region18: #{tpu_custom_call.1} parent=1 // pred_check
      _
    $region19: #{tpu_custom_call.1} parent=1 // pred_check_branch
      %32 = sbr.rel (0) target = $region21
    $region20: #{tpu_custom_call.1} parent=1 // pred_region
      _
    $region21: #{tpu_custom_call.1} parent=1 // pred_fallthru
      _
    // Predicated region
    $region22: #{tpu_custom_call.1} parent=1 // pred_check
      _
    $region23: #{tpu_custom_call.1} parent=1 // pred_check_branch
      %34 = sbr.rel (0) target = $region25
    $region24: #{tpu_custom_call.1} parent=1 // pred_region
      _
    $region25: #{tpu_custom_call.1} parent=1 // pred_fallthru
      _
    // Predicated region
    $region26: #{tpu_custom_call.1} parent=1 // pred_check
      _
    $region27: #{tpu_custom_call.1} parent=1 // pred_check_branch
      %36 = sbr.rel (0) target = $region29
    $region28: #{tpu_custom_call.1} parent=1 // pred_region
      _
    $region29: #{tpu_custom_call.1} parent=1 // pred_fallthru
      _
    // Predicated region
    $region30: #{tpu_custom_call.1} parent=1 // pred_check
      _
    $region31: #{tpu_custom_call.1} parent=1 // pred_check_branch
      %38 = sbr.rel (0) target = $region33
    $region32: #{tpu_custom_call.1} parent=1 // pred_region
      _
    $region33: #{tpu_custom_call.1} parent=1 // pred_fallthru
      _
    // Predicated region
    $region34: #{tpu_custom_call.1} parent=1 // pred_check
      _
    $region35: #{tpu_custom_call.1} parent=1 // pred_check_branch
      %40 = sbr.rel (0) target = $region37
    $region36: #{tpu_custom_call.1} parent=1 // pred_region
      _
    $region37: #{tpu_custom_call.1} parent=1 // pred_fallthru
      _
    // Predicated region
    $region38: #{tpu_custom_call.1} parent=1 // pred_check
      _
    $region39: #{tpu_custom_call.1} parent=1 // pred_check_branch
      %42 = sbr.rel (0) target = $region41
    $region40: #{tpu_custom_call.1} parent=1 // pred_region
      _
    $region41: #{tpu_custom_call.1} parent=1 // pred_fallthru
      _
    // Predicated region
    $region42: #{tpu_custom_call.1} parent=1 // pred_check
      _
    $region43: #{tpu_custom_call.1} parent=1 // pred_check_branch
      %44 = sbr.rel (0) target = $region45
    $region44: #{tpu_custom_call.1} parent=1 // pred_region
      _
    $region45: #{tpu_custom_call.1} parent=1 // pred_fallthru
      _
    // Predicated region
    $region46: #{tpu_custom_call.1} parent=1 // pred_check
      _
    $region47: #{tpu_custom_call.1} parent=1 // pred_check_branch
      %46 = sbr.rel (0) target = $region49
    $region48: #{tpu_custom_call.1} parent=1 // pred_region
      _
    $region49: #{tpu_custom_call.1} parent=1 // pred_fallthru
      _
    // Predicated region
    $region50: #{tpu_custom_call.1} parent=1 // pred_check
      _
    $region51: #{tpu_custom_call.1} parent=1 // pred_check_branch
      %48 = sbr.rel (0) target = $region53
    $region52: #{tpu_custom_call.1} parent=1 // pred_region
      _
    $region53: #{tpu_custom_call.1} parent=1 // pred_fallthru
      _
    // Predicated region
    $region54: #{tpu_custom_call.1} parent=1 // pred_check
      _
    $region55: #{tpu_custom_call.1} parent=1 // pred_check_branch
      %50 = sbr.rel (0) target = $region57
    $region56: #{tpu_custom_call.1} parent=1 // pred_region
      _
    $region57: #{tpu_custom_call.1} parent=1 // pred_fallthru
      _
    // Predicated region
    $region58: #{tpu_custom_call.1} parent=1 // pred_check
      _
    $region59: #{tpu_custom_call.1} parent=1 // pred_check_branch
      %52 = sbr.rel (0) target = $region61
    $region60: #{tpu_custom_call.1} parent=1 // pred_region
      _
    $region61: #{tpu_custom_call.1} parent=1 // pred_fallthru
      _
    // Predicated region
    $region62: #{tpu_custom_call.1} parent=1 // pred_check
      _
    $region63: #{tpu_custom_call.1} parent=1 // pred_check_branch
      %54 = sbr.rel (0) target = $region65
    $region64: #{tpu_custom_call.1} parent=1 // pred_region
      _
    $region65: #{tpu_custom_call.1} parent=1 // pred_fallthru
      _
    // Predicated region
    $region66: #{tpu_custom_call.1} parent=1 // pred_check
      _
    $region67: #{tpu_custom_call.1} parent=1 // pred_check_branch
      %56 = sbr.rel (0) target = $region69
    $region68: #{tpu_custom_call.1} parent=1 // pred_region
      _
    $region69: #{tpu_custom_call.1} parent=1 // pred_fallthru
      _
    %v57 = vld [vmem:[%s0] sm:$0x3]
    %v58 = vld [vmem:[%s2] sm:$0xff]
    %v59 = vld [vmem:[%s2 + $0x8] sm:$0xff]
    %v60 = vld [vmem:[%s4] sm:$0xff]
    %v61 = vld [vmem:[%s4 + $0x8] sm:$0xff]
    %v62 = vld [vmem:[%s4 + $0x10] sm:$0xff]
    %v63 = vld [vmem:[%s4 + $0x18] sm:$0xff]
    %v64 = vld [vmem:[%s5] sm:$0xff]
    %v65 = vld [vmem:[%s5 + $0x8] sm:$0xff]
    %v66 = vld [vmem:[%s5 + $0x10] sm:$0xff]
    %v67 = vld [vmem:[%s5 + $0x18] sm:$0xff]
    %v68 = vld [vmem:[%s6] sm:$0xff]
    %v69 = vld [vmem:[%s6 + $0x8] sm:$0xff]
    %v70 = vld [vmem:[%s6 + $0x10] sm:$0xff]
    %v71 = vld [vmem:[%s6 + $0x18] sm:$0xff]
    %v72 = vld [vmem:[%s7] sm:$0xff]
    %v73 = vld [vmem:[%s7 + $0x8] sm:$0xff]
    %v74 = vld [vmem:[%s7 + $0x10] sm:$0xff]
    %v75 = vld [vmem:[%s7 + $0x18] sm:$0xff]
    %v76 = vld [vmem:[%s8] sm:$0xff]
    %v77 = vld [vmem:[%s8 + $0x8] sm:$0xff]
    %v78 = vld [vmem:[%s9] sm:$0xff]
    %v79 = vld [vmem:[%s9 + $0x8] sm:$0xff]
    %v80 = vld [vmem:[%s10] sm:$0xff]
    %v81 = vld [vmem:[%s10 + $0x8] sm:$0xff]
    %v82 = vld [vmem:[%s11] sm:$0xff]
    %v83 = vld [vmem:[%s11 + $0x8] sm:$0xff]
    %v84 = vld [vmem:[%s12] sm:$0xff]
    %v85 = vld [vmem:[%s12 + $0x8] sm:$0xff]
    %v86 = vld [vmem:[%s13] sm:$0xff]
    %v87 = vld [vmem:[%s13 + $0x8] sm:$0xff]
    %v88 = vld [vmem:[%s14] sm:$0xff]
    %v89 = vld [vmem:[%s14 + $0x8] sm:$0xff]
    %v90 = vld [vmem:[%s15] sm:$0xff]
    %v91 = vld [vmem:[%s15 + $0x8] sm:$0xff]
    %v92 = vld [vmem:[%s16] sm:$0xff]
    %v93 = vld [vmem:[%s16 + $0x8] sm:$0xff]
    %95 = vset.pattern.permute.xlu0 0
    %96 = vperm.xlu0 %95, %v72
    %v97 = vpop.permute.xlu0 %96
    %100 = vset.pattern.permute.xlu0 0
    %101 = vperm.xlu0 %100, %v73
    %v102 = vpop.permute.xlu0 %101
    %105 = vset.pattern.permute.xlu0 0
    %106 = vperm.xlu0 %105, %v74
    %v107 = vpop.permute.xlu0 %106
    %110 = vset.pattern.permute.xlu0 0
    %111 = vperm.xlu0 %110, %v75
    %v112 = vpop.permute.xlu0 %111
    %vm114 = vcmask 130048
    %v116 = vsel %vm114, %v68, 0
    %v119 = vsel %vm114, %v69, 0
    %v122 = vsel %vm114, %v70, 0
    %v125 = vsel %vm114, %v71, 0
    %127 = vmatprep.subr.mxu0 0.0
    %128 = vmatpush1.msra.mxu0 %v58
    %129 = vmatprep.subr.mxu0 0.0
    %130 = vmatpush1.msra.mxu0 %v59
    %131 = vmatprep.subr.mxu0 0.0
    %132 = vmatpush1.msra.mxu0 0.0
    %133 = vmatprep.subr.mxu0 0.0
    %134 = vmatpush1.msra.mxu0 0.0
    %135 = vmatprep.subr.mxu0 0.0
    %136 = vmatpush1.msra.mxu0 0.0
    %137 = vmatprep.subr.mxu0 0.0
    %138 = vmatpush1.msra.mxu0 0.0
    %139 = vmatprep.subr.mxu0 0.0
    %140 = vmatpush1.msra.mxu0 0.0
    %141 = vmatprep.subr.mxu0 0.0
    %142 = vmatpush1.msra.mxu0 0.0
    %143 = vmatprep.subr.mxu0 0.0
    %144 = vmatpush1.msra.mxu0 0.0
    %145 = vmatprep.subr.mxu0 0.0
    %146 = vmatpush1.msra.mxu0 0.0
    %147 = vmatprep.subr.mxu0 0.0
    %148 = vmatpush1.msra.mxu0 0.0
    %149 = vmatprep.subr.mxu0 0.0
    %150 = vmatpush1.msra.mxu0 0.0
    %151 = vmatprep.subr.mxu0 0.0
    %152 = vmatpush1.msra.mxu0 0.0
    %153 = vmatprep.subr.mxu0 0.0
    %154 = vmatpush1.msra.mxu0 0.0
    %155 = vmatprep.subr.mxu0 0.0
    %156 = vmatpush1.msra.mxu0 0.0
    %157 = vmatprep.subr.mxu0 0.0
    %158 = vmatpush1.msra.mxu0 0.0
    %159 = vmatprep.subr.mxu0 0.0
    %160 = vmatpush1.msra.mxu0 0.0
    %161 = vmatprep.subr.mxu0 0.0
    %162 = vmatpush1.msra.mxu0 0.0
    %163 = vmatprep.subr.mxu0 0.0
    %164 = vmatpush1.msra.mxu0 0.0
    %165 = vmatprep.subr.mxu0 0.0
    %166 = vmatpush1.msra.mxu0 0.0
    %167 = vmatprep.subr.mxu0 0.0
    %168 = vmatpush1.msra.mxu0 0.0
    %169 = vmatprep.subr.mxu0 0.0
    %170 = vmatpush1.msra.mxu0 0.0
    %171 = vmatprep.subr.mxu0 0.0
    %172 = vmatpush1.msra.mxu0 0.0
    %173 = vmatprep.subr.mxu0 0.0
    %174 = vmatpush1.msra.mxu0 0.0
    %175 = vmatprep.subr.mxu0 0.0
    %176 = vmatpush1.msra.mxu0 0.0
    %177 = vmatprep.subr.mxu0 0.0
    %178 = vmatpush1.msra.mxu0 0.0
    %179 = vmatprep.subr.mxu0 0.0
    %180 = vmatpush1.msra.mxu0 0.0
    %181 = vmatprep.subr.mxu0 0.0
    %182 = vmatpush1.msra.mxu0 0.0
    %183 = vmatprep.subr.mxu0 0.0
    %184 = vmatpush1.msra.mxu0 0.0
    %185 = vmatprep.subr.mxu0 0.0
    %186 = vmatpush1.msra.mxu0 0.0
    %187 = vmatprep.subr.mxu0 0.0
    %188 = vmatpush1.msra.mxu0 0.0
    %189 = vmatprep.subr.mxu0 0.0
    %190 = vmatpush1.msra.mxu0 0.0
    %191 = vmatprep.mubr.f32.mxu0 0.0
    %192 = vmatmul.mubr.f32.gmra.mrb[0].mxu0 %v116
    %v193 = vpop.f32.mrb[0].mxu0
    %v194 = vadd.f32 %v97, %v193
    %v195 = vpop.f32.mrb[0].mxu0
    %196 = vmatprep.mubr.f32.mxu0 0.0
    %197 = vmatmul.mubr.f32.gmra.mrb[0].mxu0 %v119
    %v198 = vpop.f32.mrb[0].mxu0
    %v199 = vadd.f32 %v102, %v198
    %v200 = vpop.f32.mrb[0].mxu0
    %201 = vmatprep.mubr.f32.mxu0 0.0
    %202 = vmatmul.mubr.f32.gmra.mrb[0].mxu0 %v122
    %v203 = vpop.f32.mrb[0].mxu0
    %v204 = vadd.f32 %v107, %v203
    %v205 = vpop.f32.mrb[0].mxu0
    %206 = vmatprep.mubr.f32.mxu0 0.0
    %207 = vmatmul.mubr.f32.gmra.mrb[0].mxu0 %v125
    %v208 = vpop.f32.mrb[0].mxu0
    %v209 = vadd.f32 %v112, %v208
    %v210 = vpop.f32.mrb[0].mxu0
    %211 = vdwg.mxu0
    %v212 = vxor.u32 %v194, 2147483648
    %v213 = vxor.u32 %v199, 2147483648
    %v214 = vmul.f32 %v212, 1.442695
    %v215 = vpow.pop %v214
    %v216 = vmul.f32 %v213, 1.442695
    %v217 = vpow.pop %v216
    %v218 = vadd.f32 %v215, 1.0
    %v219 = vadd.f32 %v217, 1.0
    %v220 = vrcp.pop %v218
    %v221 = vmul.f32 1.0, %v220
    %v222 = vrcp.pop %v219
    %v223 = vmul.f32 1.0, %v222
    %v224 = vmul.f32 %v221, %v204
    %v225 = vmul.f32 %v223, %v209
    %227 = vset.pattern.permute.xlu0 0
    %228 = vperm.xlu0 %227, %v76
    %v229 = vpop.permute.xlu0 %228
    %232 = vset.pattern.permute.xlu0 0
    %233 = vperm.xlu0 %232, %v77
    %v234 = vpop.permute.xlu0 %233
    %v236 = vlaneseq
    %v237 = vshrl.u32 %v236, 7
    %v238 = vsub.s32 0, %v237
    %v239 = vrot.slane %v57, %v238
    %v240 = vmul.f32 %v229, %v239
    %v241 = vmul.f32 %v234, %v239
    %242 = vset.pattern.permute.xlu0 1
    %243 = vperm.xlu0 %242, %v76
    %v244 = vpop.permute.xlu0 %243
    %246 = vset.pattern.permute.xlu0 1
    %247 = vperm.xlu0 %246, %v77
    %v248 = vpop.permute.xlu0 %247
    %v250 = vlaneseq
    %v251 = vshrl.u32 %v250, 7
    %v252 = vsub.s32 1, %v251
    %v253 = vrot.slane %v57, %v252
    %v254 = vmul.f32 %v244, %v253
    %v255 = vmul.f32 %v248, %v253
    %v256 = vadd.f32 %v240, %v254
    %v257 = vadd.f32 %v241, %v255
    %259 = vset.pattern.permute.xlu0 0
    %260 = vperm.xlu0 %259, %v82
    %v261 = vpop.permute.xlu0 %260
    %264 = vset.pattern.permute.xlu0 0
    %265 = vperm.xlu0 %264, %v83
    %v266 = vpop.permute.xlu0 %265
    %v268 = vadd.f32 %v256, %v261
    %v269 = vadd.f32 %v257, %v266
    %v270 = vld [vmem:[%s3] sm:$0xff]
    %v271 = vld [vmem:[%s3 + $0x8] sm:$0xff]
    %v272 = vld [vmem:[%s1] sm:$0x3]
    %274 = vset.pattern.permute.xlu0 0
    %275 = vperm.xlu0 %274, %v64
    %v276 = vpop.permute.xlu0 %275
    %279 = vset.pattern.permute.xlu0 0
    %280 = vperm.xlu0 %279, %v65
    %v281 = vpop.permute.xlu0 %280
    %284 = vset.pattern.permute.xlu0 0
    %285 = vperm.xlu0 %284, %v66
    %v286 = vpop.permute.xlu0 %285
    %289 = vset.pattern.permute.xlu0 0
    %290 = vperm.xlu0 %289, %v67
    %v291 = vpop.permute.xlu0 %290
    %v294 = vsel %vm114, %v60, 0
    %v297 = vsel %vm114, %v61, 0
    %v300 = vsel %vm114, %v62, 0
    %v303 = vsel %vm114, %v63, 0
    %305 = vmatprep.subr.mxu0 0.0
    %306 = vmatpush1.msra.mxu0 %v270
    %307 = vmatprep.subr.mxu0 0.0
    %308 = vmatpush1.msra.mxu0 %v271
    %309 = vmatprep.subr.mxu0 0.0
    %310 = vmatpush1.msra.mxu0 0.0
    %311 = vmatprep.subr.mxu0 0.0
    %312 = vmatpush1.msra.mxu0 0.0
    %313 = vmatprep.subr.mxu0 0.0
    %314 = vmatpush1.msra.mxu0 0.0
    %315 = vmatprep.subr.mxu0 0.0
    %316 = vmatpush1.msra.mxu0 0.0
    %317 = vmatprep.subr.mxu0 0.0
    %318 = vmatpush1.msra.mxu0 0.0
    %319 = vmatprep.subr.mxu0 0.0
    %320 = vmatpush1.msra.mxu0 0.0
    %321 = vmatprep.subr.mxu0 0.0
    %322 = vmatpush1.msra.mxu0 0.0
    %323 = vmatprep.subr.mxu0 0.0
    %324 = vmatpush1.msra.mxu0 0.0
    %325 = vmatprep.subr.mxu0 0.0
    %326 = vmatpush1.msra.mxu0 0.0
    %327 = vmatprep.subr.mxu0 0.0
    %328 = vmatpush1.msra.mxu0 0.0
    %329 = vmatprep.subr.mxu0 0.0
    %330 = vmatpush1.msra.mxu0 0.0
    %331 = vmatprep.subr.mxu0 0.0
    %332 = vmatpush1.msra.mxu0 0.0
    %333 = vmatprep.subr.mxu0 0.0
    %334 = vmatpush1.msra.mxu0 0.0
    %335 = vmatprep.subr.mxu0 0.0
    %336 = vmatpush1.msra.mxu0 0.0
    %337 = vmatprep.subr.mxu0 0.0
    %338 = vmatpush1.msra.mxu0 0.0
    %339 = vmatprep.subr.mxu0 0.0
    %340 = vmatpush1.msra.mxu0 0.0
    %341 = vmatprep.subr.mxu0 0.0
    %342 = vmatpush1.msra.mxu0 0.0
    %343 = vmatprep.subr.mxu0 0.0
    %344 = vmatpush1.msra.mxu0 0.0
    %345 = vmatprep.subr.mxu0 0.0
    %346 = vmatpush1.msra.mxu0 0.0
    %347 = vmatprep.subr.mxu0 0.0
    %348 = vmatpush1.msra.mxu0 0.0
    %349 = vmatprep.subr.mxu0 0.0
    %350 = vmatpush1.msra.mxu0 0.0
    %351 = vmatprep.subr.mxu0 0.0
    %352 = vmatpush1.msra.mxu0 0.0
    %353 = vmatprep.subr.mxu0 0.0
    %354 = vmatpush1.msra.mxu0 0.0
    %355 = vmatprep.subr.mxu0 0.0
    %356 = vmatpush1.msra.mxu0 0.0
    %357 = vmatprep.subr.mxu0 0.0
    %358 = vmatpush1.msra.mxu0 0.0
    %359 = vmatprep.subr.mxu0 0.0
    %360 = vmatpush1.msra.mxu0 0.0
    %361 = vmatprep.subr.mxu0 0.0
    %362 = vmatpush1.msra.mxu0 0.0
    %363 = vmatprep.subr.mxu0 0.0
    %364 = vmatpush1.msra.mxu0 0.0
    %365 = vmatprep.subr.mxu0 0.0
    %366 = vmatpush1.msra.mxu0 0.0
    %367 = vmatprep.subr.mxu0 0.0
    %368 = vmatpush1.msra.mxu0 0.0
    %369 = vmatprep.mubr.f32.mxu0 0.0
    %370 = vmatmul.mubr.f32.gmra.mrb[0].mxu0 %v294
    %v371 = vpop.f32.mrb[0].mxu0
    %v372 = vadd.f32 %v276, %v371
    %v373 = vpop.f32.mrb[0].mxu0
    %374 = vmatprep.mubr.f32.mxu0 0.0
    %375 = vmatmul.mubr.f32.gmra.mrb[0].mxu0 %v297
    %v376 = vpop.f32.mrb[0].mxu0
    %v377 = vadd.f32 %v281, %v376
    %v378 = vpop.f32.mrb[0].mxu0
    %379 = vmatprep.mubr.f32.mxu0 0.0
    %380 = vmatmul.mubr.f32.gmra.mrb[0].mxu0 %v300
    %v381 = vpop.f32.mrb[0].mxu0
    %v382 = vadd.f32 %v286, %v381
    %v383 = vpop.f32.mrb[0].mxu0
    %384 = vmatprep.mubr.f32.mxu0 0.0
    %385 = vmatmul.mubr.f32.gmra.mrb[0].mxu0 %v303
    %v386 = vpop.f32.mrb[0].mxu0
    %v387 = vadd.f32 %v291, %v386
    %v388 = vpop.f32.mrb[0].mxu0
    %389 = vdwg.mxu0
    %v390 = vxor.u32 %v372, 2147483648
    %v391 = vxor.u32 %v377, 2147483648
    %v392 = vmul.f32 %v390, 1.442695
    %v393 = vpow.pop %v392
    %v394 = vmul.f32 %v391, 1.442695
    %v395 = vpow.pop %v394
    %v396 = vadd.f32 %v393, 1.0
    %v397 = vadd.f32 %v395, 1.0
    %v398 = vrcp.pop %v396
    %v399 = vmul.f32 1.0, %v398
    %v400 = vrcp.pop %v397
    %v401 = vmul.f32 1.0, %v400
    %v402 = vmul.f32 %v399, %v382
    %v403 = vmul.f32 %v401, %v387
    %v404 = vadd.f32 %v402, %v224
    %v405 = vadd.f32 %v403, %v225
    %v406 = vadd.f32 %v399, %v221
    %v407 = vadd.f32 %v401, %v223
    %v408 = vrcp.pop %v406
    %v409 = vrcp.pop %v407
    %v410 = vmul.f32 %v404, %v408
    %v411 = vmul.f32 %v405, %v409
    %v412 = vsub.f32 %v272, %v57
    %v413 = vmul.f32 %v412, %v412
    %v415 = vrot.slane %v413, 1
    %v417 = vadd.f32 %v413, %v415
    %v418 = vadd.f32 %v417, 1e-20
    %v419 = vrsqrt.pop %v418
    %v420 = vmul.f32 %v418, %v419
    %vm421 = vcmp.eq.f32.partialorder %v418, inf
    %v422 = vsel %vm421, %v418, %v420
    %vm423 = vcmp.eq.f32.partialorder %v418, 0.0
    %v424 = vand.u32 %v418, 2147483648
    %v425 = vsel %vm423, %v424, %v422
    %427 = vset.pattern.permute.xlu0 0
    %428 = vperm.xlu0 %427, %v78
    %v429 = vpop.permute.xlu0 %428
    %432 = vset.pattern.permute.xlu0 0
    %433 = vperm.xlu0 %432, %v79
    %v434 = vpop.permute.xlu0 %433
    %v436 = vlaneseq
    %v437 = vshrl.u32 %v436, 7
    %v438 = vsub.s32 0, %v437
    %v439 = vrot.slane %v272, %v438
    %v440 = vmul.f32 %v429, %v439
    %v441 = vmul.f32 %v434, %v439
    %442 = vset.pattern.permute.xlu0 1
    %443 = vperm.xlu0 %442, %v78
    %v444 = vpop.permute.xlu0 %443
    %446 = vset.pattern.permute.xlu0 1
    %447 = vperm.xlu0 %446, %v79
    %v448 = vpop.permute.xlu0 %447
    %v450 = vlaneseq
    %v451 = vshrl.u32 %v450, 7
    %v452 = vsub.s32 1, %v451
    %v453 = vrot.slane %v272, %v452
    %v454 = vmul.f32 %v444, %v453
    %v455 = vmul.f32 %v448, %v453
    %v456 = vadd.f32 %v440, %v454
    %v457 = vadd.f32 %v441, %v455
    %v458 = vadd.f32 %v268, %v456
    %v459 = vadd.f32 %v269, %v457
    %461 = vset.pattern.permute.xlu0 0
    %462 = vperm.xlu0 %461, %v80
    %v463 = vpop.permute.xlu0 %462
    %466 = vset.pattern.permute.xlu0 0
    %467 = vperm.xlu0 %466, %v81
    %v468 = vpop.permute.xlu0 %467
    %v470 = vlaneseq
    %v471 = vshrl.u32 %v470, 7
    %v472 = vsub.s32 0, %v471
    %v473 = vrot.slane %v425, %v472
    %v474 = vmul.f32 %v463, %v473
    %v475 = vmul.f32 %v468, %v473
    %v476 = vadd.f32 %v458, %v474
    %v477 = vadd.f32 %v459, %v475
    %v478 = vmax.f32 %v476, 0.0
    %v479 = vmax.f32 %v477, 0.0
    %v481 = vsel %vm114, %v86, 0
    %v484 = vsel %vm114, %v87, 0
    %486 = vmatprep.subr.mxu0 0.0
    %487 = vmatpush1.msra.mxu0 %v410
    %488 = vmatprep.subr.mxu0 0.0
    %489 = vmatpush1.msra.mxu0 %v411
    %490 = vmatprep.subr.mxu0 0.0
    %491 = vmatpush1.msra.mxu0 0.0
    %492 = vmatprep.subr.mxu0 0.0
    %493 = vmatpush1.msra.mxu0 0.0
    %494 = vmatprep.subr.mxu0 0.0
    %495 = vmatpush1.msra.mxu0 0.0
    %496 = vmatprep.subr.mxu0 0.0
    %497 = vmatpush1.msra.mxu0 0.0
    %498 = vmatprep.subr.mxu0 0.0
    %499 = vmatpush1.msra.mxu0 0.0
    %500 = vmatprep.subr.mxu0 0.0
    %501 = vmatpush1.msra.mxu0 0.0
    %502 = vmatprep.subr.mxu0 0.0
    %503 = vmatpush1.msra.mxu0 0.0
    %504 = vmatprep.subr.mxu0 0.0
    %505 = vmatpush1.msra.mxu0 0.0
    %506 = vmatprep.subr.mxu0 0.0
    %507 = vmatpush1.msra.mxu0 0.0
    %508 = vmatprep.subr.mxu0 0.0
    %509 = vmatpush1.msra.mxu0 0.0
    %510 = vmatprep.subr.mxu0 0.0
    %511 = vmatpush1.msra.mxu0 0.0
    %512 = vmatprep.subr.mxu0 0.0
    %513 = vmatpush1.msra.mxu0 0.0
    %514 = vmatprep.subr.mxu0 0.0
    %515 = vmatpush1.msra.mxu0 0.0
    %516 = vmatprep.subr.mxu0 0.0
    %517 = vmatpush1.msra.mxu0 0.0
    %518 = vmatprep.subr.mxu0 0.0
    %519 = vmatpush1.msra.mxu0 0.0
    %520 = vmatprep.subr.mxu0 0.0
    %521 = vmatpush1.msra.mxu0 0.0
    %522 = vmatprep.subr.mxu0 0.0
    %523 = vmatpush1.msra.mxu0 0.0
    %524 = vmatprep.subr.mxu0 0.0
    %525 = vmatpush1.msra.mxu0 0.0
    %526 = vmatprep.subr.mxu0 0.0
    %527 = vmatpush1.msra.mxu0 0.0
    %528 = vmatprep.subr.mxu0 0.0
    %529 = vmatpush1.msra.mxu0 0.0
    %530 = vmatprep.subr.mxu0 0.0
    %531 = vmatpush1.msra.mxu0 0.0
    %532 = vmatprep.subr.mxu0 0.0
    %533 = vmatpush1.msra.mxu0 0.0
    %534 = vmatprep.subr.mxu0 0.0
    %535 = vmatpush1.msra.mxu0 0.0
    %536 = vmatprep.subr.mxu0 0.0
    %537 = vmatpush1.msra.mxu0 0.0
    %538 = vmatprep.subr.mxu0 0.0
    %539 = vmatpush1.msra.mxu0 0.0
    %540 = vmatprep.subr.mxu0 0.0
    %541 = vmatpush1.msra.mxu0 0.0
    %542 = vmatprep.subr.mxu0 0.0
    %543 = vmatpush1.msra.mxu0 0.0
    %544 = vmatprep.subr.mxu0 0.0
    %545 = vmatpush1.msra.mxu0 0.0
    %546 = vmatprep.subr.mxu0 0.0
    %547 = vmatpush1.msra.mxu0 0.0
    %548 = vmatprep.subr.mxu0 0.0
    %549 = vmatpush1.msra.mxu0 0.0
    %550 = vmatprep.mubr.f32.mxu0 0.0
    %551 = vmatmul.mubr.f32.gmra.mrb[0].mxu0 %v481
    %v552 = vpop.f32.mrb[0].mxu0
    %v553 = vadd.f32 0.0, %v552
    %v554 = vpop.f32.mrb[0].mxu0
    %555 = vmatprep.mubr.f32.mxu0 0.0
    %556 = vmatmul.mubr.f32.gmra.mrb[0].mxu0 %v484
    %v557 = vpop.f32.mrb[0].mxu0
    %v558 = vadd.f32 0.0, %v557
    %v559 = vpop.f32.mrb[0].mxu0
    %560 = vdwg.mxu0
    %v562 = vsel %vm114, %v84, 0
    %v565 = vsel %vm114, %v85, 0
    %567 = vmatprep.subr.mxu0 0.0
    %568 = vmatpush1.msra.mxu0 %v478
    %569 = vmatprep.subr.mxu0 0.0
    %570 = vmatpush1.msra.mxu0 %v479
    %571 = vmatprep.subr.mxu0 0.0
    %572 = vmatpush1.msra.mxu0 0.0
    %573 = vmatprep.subr.mxu0 0.0
    %574 = vmatpush1.msra.mxu0 0.0
    %575 = vmatprep.subr.mxu0 0.0
    %576 = vmatpush1.msra.mxu0 0.0
    %577 = vmatprep.subr.mxu0 0.0
    %578 = vmatpush1.msra.mxu0 0.0
    %579 = vmatprep.subr.mxu0 0.0
    %580 = vmatpush1.msra.mxu0 0.0
    %581 = vmatprep.subr.mxu0 0.0
    %582 = vmatpush1.msra.mxu0 0.0
    %583 = vmatprep.subr.mxu0 0.0
    %584 = vmatpush1.msra.mxu0 0.0
    %585 = vmatprep.subr.mxu0 0.0
    %586 = vmatpush1.msra.mxu0 0.0
    %587 = vmatprep.subr.mxu0 0.0
    %588 = vmatpush1.msra.mxu0 0.0
    %589 = vmatprep.subr.mxu0 0.0
    %590 = vmatpush1.msra.mxu0 0.0
    %591 = vmatprep.subr.mxu0 0.0
    %592 = vmatpush1.msra.mxu0 0.0
    %593 = vmatprep.subr.mxu0 0.0
    %594 = vmatpush1.msra.mxu0 0.0
    %595 = vmatprep.subr.mxu0 0.0
    %596 = vmatpush1.msra.mxu0 0.0
    %597 = vmatprep.subr.mxu0 0.0
    %598 = vmatpush1.msra.mxu0 0.0
    %599 = vmatprep.subr.mxu0 0.0
    %600 = vmatpush1.msra.mxu0 0.0
    %601 = vmatprep.subr.mxu0 0.0
    %602 = vmatpush1.msra.mxu0 0.0
    %603 = vmatprep.subr.mxu0 0.0
    %604 = vmatpush1.msra.mxu0 0.0
    %605 = vmatprep.subr.mxu0 0.0
    %606 = vmatpush1.msra.mxu0 0.0
    %607 = vmatprep.subr.mxu0 0.0
    %608 = vmatpush1.msra.mxu0 0.0
    %609 = vmatprep.subr.mxu0 0.0
    %610 = vmatpush1.msra.mxu0 0.0
    %611 = vmatprep.subr.mxu0 0.0
    %612 = vmatpush1.msra.mxu0 0.0
    %613 = vmatprep.subr.mxu0 0.0
    %614 = vmatpush1.msra.mxu0 0.0
    %615 = vmatprep.subr.mxu0 0.0
    %616 = vmatpush1.msra.mxu0 0.0
    %617 = vmatprep.subr.mxu0 0.0
    %618 = vmatpush1.msra.mxu0 0.0
    %619 = vmatprep.subr.mxu0 0.0
    %620 = vmatpush1.msra.mxu0 0.0
    %621 = vmatprep.subr.mxu0 0.0
    %622 = vmatpush1.msra.mxu0 0.0
    %623 = vmatprep.subr.mxu0 0.0
    %624 = vmatpush1.msra.mxu0 0.0
    %625 = vmatprep.subr.mxu0 0.0
    %626 = vmatpush1.msra.mxu0 0.0
    %627 = vmatprep.subr.mxu0 0.0
    %628 = vmatpush1.msra.mxu0 0.0
    %629 = vmatprep.subr.mxu0 0.0
    %630 = vmatpush1.msra.mxu0 0.0
    %631 = vmatprep.mubr.f32.mxu0 0.0
    %632 = vmatmul.mubr.f32.gmra.mrb[0].mxu0 %v562
    %v633 = vpop.f32.mrb[0].mxu0
    %v634 = vadd.f32 %v553, %v633
    %v635 = vpop.f32.mrb[0].mxu0
    %636 = vmatprep.mubr.f32.mxu0 0.0
    %637 = vmatmul.mubr.f32.gmra.mrb[0].mxu0 %v565
    %v638 = vpop.f32.mrb[0].mxu0
    %v639 = vadd.f32 %v558, %v638
    %v640 = vpop.f32.mrb[0].mxu0
    %641 = vdwg.mxu0
    %643 = vset.pattern.permute.xlu0 0
    %644 = vperm.xlu0 %643, %v88
    %v645 = vpop.permute.xlu0 %644
    %648 = vset.pattern.permute.xlu0 0
    %649 = vperm.xlu0 %648, %v89
    %v650 = vpop.permute.xlu0 %649
    %v652 = vadd.f32 %v634, %v645
    %v653 = vadd.f32 %v639, %v650
    %v654 = vmax.f32 %v652, 0.0
    %v655 = vmax.f32 %v653, 0.0
    %657 = vset.pattern.permute.xlu0 0
    %658 = vperm.xlu0 %657, %v92
    %v659 = vpop.permute.xlu0 %658
    %662 = vset.pattern.permute.xlu0 0
    %663 = vperm.xlu0 %662, %v93
    %v664 = vpop.permute.xlu0 %663
    %v667 = vsel %vm114, %v90, 0
    %v670 = vsel %vm114, %v91, 0
    %672 = vmatprep.subr.mxu0 0.0
    %673 = vmatpush1.msra.mxu0 %v654
    %674 = vmatprep.subr.mxu0 0.0
    %675 = vmatpush1.msra.mxu0 %v655
    %676 = vmatprep.subr.mxu0 0.0
    %677 = vmatpush1.msra.mxu0 0.0
    %678 = vmatprep.subr.mxu0 0.0
    %679 = vmatpush1.msra.mxu0 0.0
    %680 = vmatprep.subr.mxu0 0.0
    %681 = vmatpush1.msra.mxu0 0.0
    %682 = vmatprep.subr.mxu0 0.0
    %683 = vmatpush1.msra.mxu0 0.0
    %684 = vmatprep.subr.mxu0 0.0
    %685 = vmatpush1.msra.mxu0 0.0
    %686 = vmatprep.subr.mxu0 0.0
    %687 = vmatpush1.msra.mxu0 0.0
    %688 = vmatprep.subr.mxu0 0.0
    %689 = vmatpush1.msra.mxu0 0.0
    %690 = vmatprep.subr.mxu0 0.0
    %691 = vmatpush1.msra.mxu0 0.0
    %692 = vmatprep.subr.mxu0 0.0
    %693 = vmatpush1.msra.mxu0 0.0
    %694 = vmatprep.subr.mxu0 0.0
    %695 = vmatpush1.msra.mxu0 0.0
    %696 = vmatprep.subr.mxu0 0.0
    %697 = vmatpush1.msra.mxu0 0.0
    %698 = vmatprep.subr.mxu0 0.0
    %699 = vmatpush1.msra.mxu0 0.0
    %700 = vmatprep.subr.mxu0 0.0
    %701 = vmatpush1.msra.mxu0 0.0
    %702 = vmatprep.subr.mxu0 0.0
    %703 = vmatpush1.msra.mxu0 0.0
    %704 = vmatprep.subr.mxu0 0.0
    %705 = vmatpush1.msra.mxu0 0.0
    %706 = vmatprep.subr.mxu0 0.0
    %707 = vmatpush1.msra.mxu0 0.0
    %708 = vmatprep.subr.mxu0 0.0
    %709 = vmatpush1.msra.mxu0 0.0
    %710 = vmatprep.subr.mxu0 0.0
    %711 = vmatpush1.msra.mxu0 0.0
    %712 = vmatprep.subr.mxu0 0.0
    %713 = vmatpush1.msra.mxu0 0.0
    %714 = vmatprep.subr.mxu0 0.0
    %715 = vmatpush1.msra.mxu0 0.0
    %716 = vmatprep.subr.mxu0 0.0
    %717 = vmatpush1.msra.mxu0 0.0
    %718 = vmatprep.subr.mxu0 0.0
    %719 = vmatpush1.msra.mxu0 0.0
    %720 = vmatprep.subr.mxu0 0.0
    %721 = vmatpush1.msra.mxu0 0.0
    %722 = vmatprep.subr.mxu0 0.0
    %723 = vmatpush1.msra.mxu0 0.0
    %724 = vmatprep.subr.mxu0 0.0
    %725 = vmatpush1.msra.mxu0 0.0
    %726 = vmatprep.subr.mxu0 0.0
    %727 = vmatpush1.msra.mxu0 0.0
    %728 = vmatprep.subr.mxu0 0.0
    %729 = vmatpush1.msra.mxu0 0.0
    %730 = vmatprep.subr.mxu0 0.0
    %731 = vmatpush1.msra.mxu0 0.0
    %732 = vmatprep.subr.mxu0 0.0
    %733 = vmatpush1.msra.mxu0 0.0
    %734 = vmatprep.subr.mxu0 0.0
    %735 = vmatpush1.msra.mxu0 0.0
    %736 = vmatprep.mubr.f32.mxu0 0.0
    %737 = vmatmul.mubr.f32.gmra.mrb[0].mxu0 %v667
    %v738 = vpop.f32.mrb[0].mxu0
    %v739 = vadd.f32 %v659, %v738
    %v740 = vpop.f32.mrb[0].mxu0
    %741 = vmatprep.mubr.f32.mxu0 0.0
    %742 = vmatmul.mubr.f32.gmra.mrb[0].mxu0 %v670
    %v743 = vpop.f32.mrb[0].mxu0
    %v744 = vadd.f32 %v664, %v743
    %v745 = vpop.f32.mrb[0].mxu0
    %746 = vdwg.mxu0
    %v747 = vmax.f32 %v739, 0.0
    %v748 = vmax.f32 %v744, 0.0
    %s749 = scalar_lea.vmem %s3, 16
    %v750 = vld [vmem:[%s749] sm:$0xff]
    %v751 = vld [vmem:[%s749 + $0x8] sm:$0xff]
    %s752 = scalar_lea.vmem %s1, 2
    %v753 = vld [vmem:[%s752] sm:$0x3]
    %754 = vmatprep.subr.mxu0 0.0
    %755 = vmatpush1.msra.mxu0 %v750
    %756 = vmatprep.subr.mxu0 0.0
    %757 = vmatpush1.msra.mxu0 %v751
    %758 = vmatprep.subr.mxu0 0.0
    %759 = vmatpush1.msra.mxu0 0.0
    %760 = vmatprep.subr.mxu0 0.0
    %761 = vmatpush1.msra.mxu0 0.0
    %762 = vmatprep.subr.mxu0 0.0
    %763 = vmatpush1.msra.mxu0 0.0
    %764 = vmatprep.subr.mxu0 0.0
    %765 = vmatpush1.msra.mxu0 0.0
    %766 = vmatprep.subr.mxu0 0.0
    %767 = vmatpush1.msra.mxu0 0.0
    %768 = vmatprep.subr.mxu0 0.0
    %769 = vmatpush1.msra.mxu0 0.0
    %770 = vmatprep.subr.mxu0 0.0
    %771 = vmatpush1.msra.mxu0 0.0
    %772 = vmatprep.subr.mxu0 0.0
    %773 = vmatpush1.msra.mxu0 0.0
    %774 = vmatprep.subr.mxu0 0.0
    %775 = vmatpush1.msra.mxu0 0.0
    %776 = vmatprep.subr.mxu0 0.0
    %777 = vmatpush1.msra.mxu0 0.0
    %778 = vmatprep.subr.mxu0 0.0
    %779 = vmatpush1.msra.mxu0 0.0
    %780 = vmatprep.subr.mxu0 0.0
    %781 = vmatpush1.msra.mxu0 0.0
    %782 = vmatprep.subr.mxu0 0.0
    %783 = vmatpush1.msra.mxu0 0.0
    %784 = vmatprep.subr.mxu0 0.0
    %785 = vmatpush1.msra.mxu0 0.0
    %786 = vmatprep.subr.mxu0 0.0
    %787 = vmatpush1.msra.mxu0 0.0
    %788 = vmatprep.subr.mxu0 0.0
    %789 = vmatpush1.msra.mxu0 0.0
    %790 = vmatprep.subr.mxu0 0.0
    %791 = vmatpush1.msra.mxu0 0.0
    %792 = vmatprep.subr.mxu0 0.0
    %793 = vmatpush1.msra.mxu0 0.0
    %794 = vmatprep.subr.mxu0 0.0
    %795 = vmatpush1.msra.mxu0 0.0
    %796 = vmatprep.subr.mxu0 0.0
    %797 = vmatpush1.msra.mxu0 0.0
    %798 = vmatprep.subr.mxu0 0.0
    %799 = vmatpush1.msra.mxu0 0.0
    %800 = vmatprep.subr.mxu0 0.0
    %801 = vmatpush1.msra.mxu0 0.0
    %802 = vmatprep.subr.mxu0 0.0
    %803 = vmatpush1.msra.mxu0 0.0
    %804 = vmatprep.subr.mxu0 0.0
    %805 = vmatpush1.msra.mxu0 0.0
    %806 = vmatprep.subr.mxu0 0.0
    %807 = vmatpush1.msra.mxu0 0.0
    %808 = vmatprep.subr.mxu0 0.0
    %809 = vmatpush1.msra.mxu0 0.0
    %810 = vmatprep.subr.mxu0 0.0
    %811 = vmatpush1.msra.mxu0 0.0
    %812 = vmatprep.subr.mxu0 0.0
    %813 = vmatpush1.msra.mxu0 0.0
    %814 = vmatprep.subr.mxu0 0.0
    %815 = vmatpush1.msra.mxu0 0.0
    %816 = vmatprep.subr.mxu0 0.0
    %817 = vmatpush1.msra.mxu0 0.0
    %818 = vmatprep.mubr.f32.mxu0 0.0
    %819 = vmatmul.mubr.f32.gmra.mrb[0].mxu0 %v294
    %v820 = vpop.f32.mrb[0].mxu0
    %v821 = vadd.f32 %v276, %v820
    %v822 = vpop.f32.mrb[0].mxu0
    %823 = vmatprep.mubr.f32.mxu0 0.0
    %824 = vmatmul.mubr.f32.gmra.mrb[0].mxu0 %v297
    %v825 = vpop.f32.mrb[0].mxu0
    %v826 = vadd.f32 %v281, %v825
    %v827 = vpop.f32.mrb[0].mxu0
    %828 = vmatprep.mubr.f32.mxu0 0.0
    %829 = vmatmul.mubr.f32.gmra.mrb[0].mxu0 %v300
    %v830 = vpop.f32.mrb[0].mxu0
    %v831 = vadd.f32 %v286, %v830
    %v832 = vpop.f32.mrb[0].mxu0
    %833 = vmatprep.mubr.f32.mxu0 0.0
    %834 = vmatmul.mubr.f32.gmra.mrb[0].mxu0 %v303
    %v835 = vpop.f32.mrb[0].mxu0
    %v836 = vadd.f32 %v291, %v835
    %v837 = vpop.f32.mrb[0].mxu0
    %838 = vdwg.mxu0
    %v839 = vxor.u32 %v821, 2147483648
    %v840 = vxor.u32 %v826, 2147483648
    %v841 = vmul.f32 %v839, 1.442695
    %v842 = vpow.pop %v841
    %v843 = vmul.f32 %v840, 1.442695
    %v844 = vpow.pop %v843
    %v845 = vadd.f32 %v842, 1.0
    %v846 = vadd.f32 %v844, 1.0
    %v847 = vrcp.pop %v845
    %v848 = vmul.f32 1.0, %v847
    %v849 = vrcp.pop %v846
    %v850 = vmul.f32 1.0, %v849
    %v851 = vmul.f32 %v848, %v831
    %v852 = vmul.f32 %v850, %v836
    %v853 = vadd.f32 %v851, %v224
    %v854 = vadd.f32 %v852, %v225
    %v855 = vadd.f32 %v848, %v221
    %v856 = vadd.f32 %v850, %v223
    %v857 = vrcp.pop %v855
    %v858 = vrcp.pop %v856
    %v859 = vmul.f32 %v853, %v857
    %v860 = vmul.f32 %v854, %v858
    %v861 = vsub.f32 %v753, %v57
    %v862 = vmul.f32 %v861, %v861
    %v864 = vrot.slane %v862, 1
    %v866 = vadd.f32 %v862, %v864
    %v867 = vadd.f32 %v866, 1e-20
    %v868 = vrsqrt.pop %v867
    %v869 = vmul.f32 %v867, %v868
    %vm870 = vcmp.eq.f32.partialorder %v867, inf
    %v871 = vsel %vm870, %v867, %v869
    %vm872 = vcmp.eq.f32.partialorder %v867, 0.0
    %v873 = vand.u32 %v867, 2147483648
    %v874 = vsel %vm872, %v873, %v871
    %v875 = vlaneseq
    %v876 = vshrl.u32 %v875, 7
    %v877 = vsub.s32 0, %v876
    %v878 = vrot.slane %v753, %v877
    %v879 = vmul.f32 %v429, %v878
    %v880 = vmul.f32 %v434, %v878
    %v881 = vlaneseq
    %v882 = vshrl.u32 %v881, 7
    %v883 = vsub.s32 1, %v882
    %v884 = vrot.slane %v753, %v883
    %v885 = vmul.f32 %v444, %v884
    %v886 = vmul.f32 %v448, %v884
    %v887 = vadd.f32 %v879, %v885
    %v888 = vadd.f32 %v880, %v886
    %v889 = vadd.f32 %v268, %v887
    %v890 = vadd.f32 %v269, %v888
    %v891 = vlaneseq
    %v892 = vshrl.u32 %v891, 7
    %v893 = vsub.s32 0, %v892
    %v894 = vrot.slane %v874, %v893
    %v895 = vmul.f32 %v463, %v894
    %v896 = vmul.f32 %v468, %v894
    %v897 = vadd.f32 %v889, %v895
    %v898 = vadd.f32 %v890, %v896
    %v899 = vmax.f32 %v897, 0.0
    %v900 = vmax.f32 %v898, 0.0
    %901 = vmatprep.subr.mxu0 0.0
    %902 = vmatpush1.msra.mxu0 %v859
    %903 = vmatprep.subr.mxu0 0.0
    %904 = vmatpush1.msra.mxu0 %v860
    %905 = vmatprep.subr.mxu0 0.0
    %906 = vmatpush1.msra.mxu0 0.0
    %907 = vmatprep.subr.mxu0 0.0
    %908 = vmatpush1.msra.mxu0 0.0
    %909 = vmatprep.subr.mxu0 0.0
    %910 = vmatpush1.msra.mxu0 0.0
    %911 = vmatprep.subr.mxu0 0.0
    %912 = vmatpush1.msra.mxu0 0.0
    %913 = vmatprep.subr.mxu0 0.0
    %914 = vmatpush1.msra.mxu0 0.0
    %915 = vmatprep.subr.mxu0 0.0
    %916 = vmatpush1.msra.mxu0 0.0
    %917 = vmatprep.subr.mxu0 0.0
    %918 = vmatpush1.msra.mxu0 0.0
    %919 = vmatprep.subr.mxu0 0.0
    %920 = vmatpush1.msra.mxu0 0.0
    %921 = vmatprep.subr.mxu0 0.0
    %922 = vmatpush1.msra.mxu0 0.0
    %923 = vmatprep.subr.mxu0 0.0
    %924 = vmatpush1.msra.mxu0 0.0
    %925 = vmatprep.subr.mxu0 0.0
    %926 = vmatpush1.msra.mxu0 0.0
    %927 = vmatprep.subr.mxu0 0.0
    %928 = vmatpush1.msra.mxu0 0.0
    %929 = vmatprep.subr.mxu0 0.0
    %930 = vmatpush1.msra.mxu0 0.0
    %931 = vmatprep.subr.mxu0 0.0
    %932 = vmatpush1.msra.mxu0 0.0
    %933 = vmatprep.subr.mxu0 0.0
    %934 = vmatpush1.msra.mxu0 0.0
    %935 = vmatprep.subr.mxu0 0.0
    %936 = vmatpush1.msra.mxu0 0.0
    %937 = vmatprep.subr.mxu0 0.0
    %938 = vmatpush1.msra.mxu0 0.0
    %939 = vmatprep.subr.mxu0 0.0
    %940 = vmatpush1.msra.mxu0 0.0
    %941 = vmatprep.subr.mxu0 0.0
    %942 = vmatpush1.msra.mxu0 0.0
    %943 = vmatprep.subr.mxu0 0.0
    %944 = vmatpush1.msra.mxu0 0.0
    %945 = vmatprep.subr.mxu0 0.0
    %946 = vmatpush1.msra.mxu0 0.0
    %947 = vmatprep.subr.mxu0 0.0
    %948 = vmatpush1.msra.mxu0 0.0
    %949 = vmatprep.subr.mxu0 0.0
    %950 = vmatpush1.msra.mxu0 0.0
    %951 = vmatprep.subr.mxu0 0.0
    %952 = vmatpush1.msra.mxu0 0.0
    %953 = vmatprep.subr.mxu0 0.0
    %954 = vmatpush1.msra.mxu0 0.0
    %955 = vmatprep.subr.mxu0 0.0
    %956 = vmatpush1.msra.mxu0 0.0
    %957 = vmatprep.subr.mxu0 0.0
    %958 = vmatpush1.msra.mxu0 0.0
    %959 = vmatprep.subr.mxu0 0.0
    %960 = vmatpush1.msra.mxu0 0.0
    %961 = vmatprep.subr.mxu0 0.0
    %962 = vmatpush1.msra.mxu0 0.0
    %963 = vmatprep.subr.mxu0 0.0
    %964 = vmatpush1.msra.mxu0 0.0
    %965 = vmatprep.mubr.f32.mxu0 0.0
    %966 = vmatmul.mubr.f32.gmra.mrb[0].mxu0 %v481
    %v967 = vpop.f32.mrb[0].mxu0
    %v968 = vadd.f32 0.0, %v967
    %v969 = vpop.f32.mrb[0].mxu0
    %970 = vmatprep.mubr.f32.mxu0 0.0
    %971 = vmatmul.mubr.f32.gmra.mrb[0].mxu0 %v484
    %v972 = vpop.f32.mrb[0].mxu0
    %v973 = vadd.f32 0.0, %v972
    %v974 = vpop.f32.mrb[0].mxu0
    %975 = vdwg.mxu0
    %976 = vmatprep.subr.mxu0 0.0
    %977 = vmatpush1.msra.mxu0 %v899
    %978 = vmatprep.subr.mxu0 0.0
    %979 = vmatpush1.msra.mxu0 %v900
    %980 = vmatprep.subr.mxu0 0.0
    %981 = vmatpush1.msra.mxu0 0.0
    %982 = vmatprep.subr.mxu0 0.0
    %983 = vmatpush1.msra.mxu0 0.0
    %984 = vmatprep.subr.mxu0 0.0
    %985 = vmatpush1.msra.mxu0 0.0
    %986 = vmatprep.subr.mxu0 0.0
    %987 = vmatpush1.msra.mxu0 0.0
    %988 = vmatprep.subr.mxu0 0.0
    %989 = vmatpush1.msra.mxu0 0.0
    %990 = vmatprep.subr.mxu0 0.0
    %991 = vmatpush1.msra.mxu0 0.0
    %992 = vmatprep.subr.mxu0 0.0
    %993 = vmatpush1.msra.mxu0 0.0
    %994 = vmatprep.subr.mxu0 0.0
    %995 = vmatpush1.msra.mxu0 0.0
    %996 = vmatprep.subr.mxu0 0.0
    %997 = vmatpush1.msra.mxu0 0.0
    %998 = vmatprep.subr.mxu0 0.0
    %999 = vmatpush1.msra.mxu0 0.0
    %1000 = vmatprep.subr.mxu0 0.0
    %1001 = vmatpush1.msra.mxu0 0.0
    %1002 = vmatprep.subr.mxu0 0.0
    %1003 = vmatpush1.msra.mxu0 0.0
    %1004 = vmatprep.subr.mxu0 0.0
    %1005 = vmatpush1.msra.mxu0 0.0
    %1006 = vmatprep.subr.mxu0 0.0
    %1007 = vmatpush1.msra.mxu0 0.0
    %1008 = vmatprep.subr.mxu0 0.0
    %1009 = vmatpush1.msra.mxu0 0.0
    %1010 = vmatprep.subr.mxu0 0.0
    %1011 = vmatpush1.msra.mxu0 0.0
    %1012 = vmatprep.subr.mxu0 0.0
    %1013 = vmatpush1.msra.mxu0 0.0
    %1014 = vmatprep.subr.mxu0 0.0
    %1015 = vmatpush1.msra.mxu0 0.0
    %1016 = vmatprep.subr.mxu0 0.0
    %1017 = vmatpush1.msra.mxu0 0.0
    %1018 = vmatprep.subr.mxu0 0.0
    %1019 = vmatpush1.msra.mxu0 0.0
    %1020 = vmatprep.subr.mxu0 0.0
    %1021 = vmatpush1.msra.mxu0 0.0
    %1022 = vmatprep.subr.mxu0 0.0
    %1023 = vmatpush1.msra.mxu0 0.0
    %1024 = vmatprep.subr.mxu0 0.0
    %1025 = vmatpush1.msra.mxu0 0.0
    %1026 = vmatprep.subr.mxu0 0.0
    %1027 = vmatpush1.msra.mxu0 0.0
    %1028 = vmatprep.subr.mxu0 0.0
    %1029 = vmatpush1.msra.mxu0 0.0
    %1030 = vmatprep.subr.mxu0 0.0
    %1031 = vmatpush1.msra.mxu0 0.0
    %1032 = vmatprep.subr.mxu0 0.0
    %1033 = vmatpush1.msra.mxu0 0.0
    %1034 = vmatprep.subr.mxu0 0.0
    %1035 = vmatpush1.msra.mxu0 0.0
    %1036 = vmatprep.subr.mxu0 0.0
    %1037 = vmatpush1.msra.mxu0 0.0
    %1038 = vmatprep.subr.mxu0 0.0
    %1039 = vmatpush1.msra.mxu0 0.0
    %1040 = vmatprep.mubr.f32.mxu0 0.0
    %1041 = vmatmul.mubr.f32.gmra.mrb[0].mxu0 %v562
    %v1042 = vpop.f32.mrb[0].mxu0
    %v1043 = vadd.f32 %v968, %v1042
    %v1044 = vpop.f32.mrb[0].mxu0
    %1045 = vmatprep.mubr.f32.mxu0 0.0
    %1046 = vmatmul.mubr.f32.gmra.mrb[0].mxu0 %v565
    %v1047 = vpop.f32.mrb[0].mxu0
    %v1048 = vadd.f32 %v973, %v1047
    %v1049 = vpop.f32.mrb[0].mxu0
    %1050 = vdwg.mxu0
    %v1051 = vadd.f32 %v1043, %v645
    %v1052 = vadd.f32 %v1048, %v650
    %v1053 = vmax.f32 %v1051, 0.0
    %v1054 = vmax.f32 %v1052, 0.0
    %1055 = vmatprep.subr.mxu0 0.0
    %1056 = vmatpush1.msra.mxu0 %v1053
    %1057 = vmatprep.subr.mxu0 0.0
    %1058 = vmatpush1.msra.mxu0 %v1054
    %1059 = vmatprep.subr.mxu0 0.0
    %1060 = vmatpush1.msra.mxu0 0.0
    %1061 = vmatprep.subr.mxu0 0.0
    %1062 = vmatpush1.msra.mxu0 0.0
    %1063 = vmatprep.subr.mxu0 0.0
    %1064 = vmatpush1.msra.mxu0 0.0
    %1065 = vmatprep.subr.mxu0 0.0
    %1066 = vmatpush1.msra.mxu0 0.0
    %1067 = vmatprep.subr.mxu0 0.0
    %1068 = vmatpush1.msra.mxu0 0.0
    %1069 = vmatprep.subr.mxu0 0.0
    %1070 = vmatpush1.msra.mxu0 0.0
    %1071 = vmatprep.subr.mxu0 0.0
    %1072 = vmatpush1.msra.mxu0 0.0
    %1073 = vmatprep.subr.mxu0 0.0
    %1074 = vmatpush1.msra.mxu0 0.0
    %1075 = vmatprep.subr.mxu0 0.0
    %1076 = vmatpush1.msra.mxu0 0.0
    %1077 = vmatprep.subr.mxu0 0.0
    %1078 = vmatpush1.msra.mxu0 0.0
    %1079 = vmatprep.subr.mxu0 0.0
    %1080 = vmatpush1.msra.mxu0 0.0
    %1081 = vmatprep.subr.mxu0 0.0
    %1082 = vmatpush1.msra.mxu0 0.0
    %1083 = vmatprep.subr.mxu0 0.0
    %1084 = vmatpush1.msra.mxu0 0.0
    %1085 = vmatprep.subr.mxu0 0.0
    %1086 = vmatpush1.msra.mxu0 0.0
    %1087 = vmatprep.subr.mxu0 0.0
    %1088 = vmatpush1.msra.mxu0 0.0
    %1089 = vmatprep.subr.mxu0 0.0
    %1090 = vmatpush1.msra.mxu0 0.0
    %1091 = vmatprep.subr.mxu0 0.0
    %1092 = vmatpush1.msra.mxu0 0.0
    %1093 = vmatprep.subr.mxu0 0.0
    %1094 = vmatpush1.msra.mxu0 0.0
    %1095 = vmatprep.subr.mxu0 0.0
    %1096 = vmatpush1.msra.mxu0 0.0
    %1097 = vmatprep.subr.mxu0 0.0
    %1098 = vmatpush1.msra.mxu0 0.0
    %1099 = vmatprep.subr.mxu0 0.0
    %1100 = vmatpush1.msra.mxu0 0.0
    %1101 = vmatprep.subr.mxu0 0.0
    %1102 = vmatpush1.msra.mxu0 0.0
    %1103 = vmatprep.subr.mxu0 0.0
    %1104 = vmatpush1.msra.mxu0 0.0
    %1105 = vmatprep.subr.mxu0 0.0
    %1106 = vmatpush1.msra.mxu0 0.0
    %1107 = vmatprep.subr.mxu0 0.0
    %1108 = vmatpush1.msra.mxu0 0.0
    %1109 = vmatprep.subr.mxu0 0.0
    %1110 = vmatpush1.msra.mxu0 0.0
    %1111 = vmatprep.subr.mxu0 0.0
    %1112 = vmatpush1.msra.mxu0 0.0
    %1113 = vmatprep.subr.mxu0 0.0
    %1114 = vmatpush1.msra.mxu0 0.0
    %1115 = vmatprep.subr.mxu0 0.0
    %1116 = vmatpush1.msra.mxu0 0.0
    %1117 = vmatprep.subr.mxu0 0.0
    %1118 = vmatpush1.msra.mxu0 0.0
    %1119 = vmatprep.mubr.f32.mxu0 0.0
    %1120 = vmatmul.mubr.f32.gmra.mrb[0].mxu0 %v667
    %v1121 = vpop.f32.mrb[0].mxu0
    %v1122 = vadd.f32 %v659, %v1121
    %v1123 = vpop.f32.mrb[0].mxu0
    %1124 = vmatprep.mubr.f32.mxu0 0.0
    %1125 = vmatmul.mubr.f32.gmra.mrb[0].mxu0 %v670
    %v1126 = vpop.f32.mrb[0].mxu0
    %v1127 = vadd.f32 %v664, %v1126
    %v1128 = vpop.f32.mrb[0].mxu0
    %1129 = vdwg.mxu0
    %v1130 = vmax.f32 %v1122, 0.0
    %v1131 = vmax.f32 %v1127, 0.0
    %v1132 = vmax.f32 %v747, %v1130
    %v1133 = vmax.f32 %v748, %v1131
    %v1134 = vsub.f32 %v747, %v1132
    %v1135 = vsub.f32 %v748, %v1133
    %v1136 = vmul.f32 %v1134, 1.442695
    %v1137 = vpow.pop %v1136
    %v1138 = vmul.f32 %v1135, 1.442695
    %v1139 = vpow.pop %v1138
    %v1140 = vsub.f32 %v1130, %v1132
    %v1141 = vsub.f32 %v1131, %v1133
    %v1142 = vmul.f32 %v1140, 1.442695
    %v1143 = vpow.pop %v1142
    %v1144 = vmul.f32 %v1141, 1.442695
    %v1145 = vpow.pop %v1144
    %v1146 = vadd.f32 %v1137, %v1143
    %v1147 = vadd.f32 %v1139, %v1145
    %v1148 = vmul.f32 %v1137, %v410
    %v1149 = vmul.f32 %v1139, %v411
    %v1150 = vmul.f32 %v1143, %v859
    %v1151 = vmul.f32 %v1145, %v860
    %v1152 = vadd.f32 %v1148, %v1150
    %v1153 = vadd.f32 %v1149, %v1151
    %s1154 = scalar_lea.vmem %s3, 32
    %v1155 = vld [vmem:[%s1154] sm:$0xff]
    %v1156 = vld [vmem:[%s1154 + $0x8] sm:$0xff]
    %s1157 = scalar_lea.vmem %s1, 4
    %v1158 = vld [vmem:[%s1157] sm:$0x3]
    %1159 = vmatprep.subr.mxu0 0.0
    %1160 = vmatpush1.msra.mxu0 %v1155
    %1161 = vmatprep.subr.mxu0 0.0
    %1162 = vmatpush1.msra.mxu0 %v1156
    %1163 = vmatprep.subr.mxu0 0.0
    %1164 = vmatpush1.msra.mxu0 0.0
    %1165 = vmatprep.subr.mxu0 0.0
    %1166 = vmatpush1.msra.mxu0 0.0
    %1167 = vmatprep.subr.mxu0 0.0
    %1168 = vmatpush1.msra.mxu0 0.0
    %1169 = vmatprep.subr.mxu0 0.0
    %1170 = vmatpush1.msra.mxu0 0.0
    %1171 = vmatprep.subr.mxu0 0.0
    %1172 = vmatpush1.msra.mxu0 0.0
    %1173 = vmatprep.subr.mxu0 0.0
    %1174 = vmatpush1.msra.mxu0 0.0
    %1175 = vmatprep.subr.mxu0 0.0
    %1176 = vmatpush1.msra.mxu0 0.0
    %1177 = vmatprep.subr.mxu0 0.0
    %1178 = vmatpush1.msra.mxu0 0.0
    %1179 = vmatprep.subr.mxu0 0.0
    %1180 = vmatpush1.msra.mxu0 0.0
    %1181 = vmatprep.subr.mxu0 0.0
    %1182 = vmatpush1.msra.mxu0 0.0
    %1183 = vmatprep.subr.mxu0 0.0
    %1184 = vmatpush1.msra.mxu0 0.0
    %1185 = vmatprep.subr.mxu0 0.0
    %1186 = vmatpush1.msra.mxu0 0.0
    %1187 = vmatprep.subr.mxu0 0.0
    %1188 = vmatpush1.msra.mxu0 0.0
    %1189 = vmatprep.subr.mxu0 0.0
    %1190 = vmatpush1.msra.mxu0 0.0
    %1191 = vmatprep.subr.mxu0 0.0
    %1192 = vmatpush1.msra.mxu0 0.0
    %1193 = vmatprep.subr.mxu0 0.0
    %1194 = vmatpush1.msra.mxu0 0.0
    %1195 = vmatprep.subr.mxu0 0.0
    %1196 = vmatpush1.msra.mxu0 0.0
    %1197 = vmatprep.subr.mxu0 0.0
    %1198 = vmatpush1.msra.mxu0 0.0
    %1199 = vmatprep.subr.mxu0 0.0
    %1200 = vmatpush1.msra.mxu0 0.0
    %1201 = vmatprep.subr.mxu0 0.0
    %1202 = vmatpush1.msra.mxu0 0.0
    %1203 = vmatprep.subr.mxu0 0.0
    %1204 = vmatpush1.msra.mxu0 0.0
    %1205 = vmatprep.subr.mxu0 0.0
    %1206 = vmatpush1.msra.mxu0 0.0
    %1207 = vmatprep.subr.mxu0 0.0
    %1208 = vmatpush1.msra.mxu0 0.0
    %1209 = vmatprep.subr.mxu0 0.0
    %1210 = vmatpush1.msra.mxu0 0.0
    %1211 = vmatprep.subr.mxu0 0.0
    %1212 = vmatpush1.msra.mxu0 0.0
    %1213 = vmatprep.subr.mxu0 0.0
    %1214 = vmatpush1.msra.mxu0 0.0
    %1215 = vmatprep.subr.mxu0 0.0
    %1216 = vmatpush1.msra.mxu0 0.0
    %1217 = vmatprep.subr.mxu0 0.0
    %1218 = vmatpush1.msra.mxu0 0.0
    %1219 = vmatprep.subr.mxu0 0.0
    %1220 = vmatpush1.msra.mxu0 0.0
    %1221 = vmatprep.subr.mxu0 0.0
    %1222 = vmatpush1.msra.mxu0 0.0
    %1223 = vmatprep.mubr.f32.mxu0 0.0
    %1224 = vmatmul.mubr.f32.gmra.mrb[0].mxu0 %v294
    %v1225 = vpop.f32.mrb[0].mxu0
    %v1226 = vadd.f32 %v276, %v1225
    %v1227 = vpop.f32.mrb[0].mxu0
    %1228 = vmatprep.mubr.f32.mxu0 0.0
    %1229 = vmatmul.mubr.f32.gmra.mrb[0].mxu0 %v297
    %v1230 = vpop.f32.mrb[0].mxu0
    %v1231 = vadd.f32 %v281, %v1230
    %v1232 = vpop.f32.mrb[0].mxu0
    %1233 = vmatprep.mubr.f32.mxu0 0.0
    %1234 = vmatmul.mubr.f32.gmra.mrb[0].mxu0 %v300
    %v1235 = vpop.f32.mrb[0].mxu0
    %v1236 = vadd.f32 %v286, %v1235
    %v1237 = vpop.f32.mrb[0].mxu0
    %1238 = vmatprep.mubr.f32.mxu0 0.0
    %1239 = vmatmul.mubr.f32.gmra.mrb[0].mxu0 %v303
    %v1240 = vpop.f32.mrb[0].mxu0
    %v1241 = vadd.f32 %v291, %v1240
    %v1242 = vpop.f32.mrb[0].mxu0
    %1243 = vdwg.mxu0
    %v1244 = vxor.u32 %v1226, 2147483648
    %v1245 = vxor.u32 %v1231, 2147483648
    %v1246 = vmul.f32 %v1244, 1.442695
    %v1247 = vpow.pop %v1246
    %v1248 = vmul.f32 %v1245, 1.442695
    %v1249 = vpow.pop %v1248
    %v1250 = vadd.f32 %v1247, 1.0
    %v1251 = vadd.f32 %v1249, 1.0
    %v1252 = vrcp.pop %v1250
    %v1253 = vmul.f32 1.0, %v1252
    %v1254 = vrcp.pop %v1251
    %v1255 = vmul.f32 1.0, %v1254
    %v1256 = vmul.f32 %v1253, %v1236
    %v1257 = vmul.f32 %v1255, %v1241
    %v1258 = vadd.f32 %v1256, %v224
    %v1259 = vadd.f32 %v1257, %v225
    %v1260 = vadd.f32 %v1253, %v221
    %v1261 = vadd.f32 %v1255, %v223
    %v1262 = vrcp.pop %v1260
    %v1263 = vrcp.pop %v1261
    %v1264 = vmul.f32 %v1258, %v1262
    %v1265 = vmul.f32 %v1259, %v1263
    %v1266 = vsub.f32 %v1158, %v57
    %v1267 = vmul.f32 %v1266, %v1266
    %v1269 = vrot.slane %v1267, 1
    %v1271 = vadd.f32 %v1267, %v1269
    %v1272 = vadd.f32 %v1271, 1e-20
    %v1273 = vrsqrt.pop %v1272
    %v1274 = vmul.f32 %v1272, %v1273
    %vm1275 = vcmp.eq.f32.partialorder %v1272, inf
    %v1276 = vsel %vm1275, %v1272, %v1274
    %vm1277 = vcmp.eq.f32.partialorder %v1272, 0.0
    %v1278 = vand.u32 %v1272, 2147483648
    %v1279 = vsel %vm1277, %v1278, %v1276
    %v1280 = vlaneseq
    %v1281 = vshrl.u32 %v1280, 7
    %v1282 = vsub.s32 0, %v1281
    %v1283 = vrot.slane %v1158, %v1282
    %v1284 = vmul.f32 %v429, %v1283
    %v1285 = vmul.f32 %v434, %v1283
    %v1286 = vlaneseq
    %v1287 = vshrl.u32 %v1286, 7
    %v1288 = vsub.s32 1, %v1287
    %v1289 = vrot.slane %v1158, %v1288
    %v1290 = vmul.f32 %v444, %v1289
    %v1291 = vmul.f32 %v448, %v1289
    %v1292 = vadd.f32 %v1284, %v1290
    %v1293 = vadd.f32 %v1285, %v1291
    %v1294 = vadd.f32 %v268, %v1292
    %v1295 = vadd.f32 %v269, %v1293
    %v1296 = vlaneseq
    %v1297 = vshrl.u32 %v1296, 7
    %v1298 = vsub.s32 0, %v1297
    %v1299 = vrot.slane %v1279, %v1298
    %v1300 = vmul.f32 %v463, %v1299
    %v1301 = vmul.f32 %v468, %v1299
    %v1302 = vadd.f32 %v1294, %v1300
    %v1303 = vadd.f32 %v1295, %v1301
    %v1304 = vmax.f32 %v1302, 0.0
    %v1305 = vmax.f32 %v1303, 0.0
    %1306 = vmatprep.subr.mxu0 0.0
    %1307 = vmatpush1.msra.mxu0 %v1264
    %1308 = vmatprep.subr.mxu0 0.0
    %1309 = vmatpush1.msra.mxu0 %v1265
    %1310 = vmatprep.subr.mxu0 0.0
    %1311 = vmatpush1.msra.mxu0 0.0
    %1312 = vmatprep.subr.mxu0 0.0
    %1313 = vmatpush1.msra.mxu0 0.0
    %1314 = vmatprep.subr.mxu0 0.0
    %1315 = vmatpush1.msra.mxu0 0.0
    %1316 = vmatprep.subr.mxu0 0.0
    %1317 = vmatpush1.msra.mxu0 0.0
    %1318 = vmatprep.subr.mxu0 0.0
    %1319 = vmatpush1.msra.mxu0 0.0
    %1320 = vmatprep.subr.mxu0 0.0
    %1321 = vmatpush1.msra.mxu0 0.0
    %1322 = vmatprep.subr.mxu0 0.0
    %1323 = vmatpush1.msra.mxu0 0.0
    %1324 = vmatprep.subr.mxu0 0.0
    %1325 = vmatpush1.msra.mxu0 0.0
    %1326 = vmatprep.subr.mxu0 0.0
    %1327 = vmatpush1.msra.mxu0 0.0
    %1328 = vmatprep.subr.mxu0 0.0
    %1329 = vmatpush1.msra.mxu0 0.0
    %1330 = vmatprep.subr.mxu0 0.0
    %1331 = vmatpush1.msra.mxu0 0.0
    %1332 = vmatprep.subr.mxu0 0.0
    %1333 = vmatpush1.msra.mxu0 0.0
    %1334 = vmatprep.subr.mxu0 0.0
    %1335 = vmatpush1.msra.mxu0 0.0
    %1336 = vmatprep.subr.mxu0 0.0
    %1337 = vmatpush1.msra.mxu0 0.0
    %1338 = vmatprep.subr.mxu0 0.0
    %1339 = vmatpush1.msra.mxu0 0.0
    %1340 = vmatprep.subr.mxu0 0.0
    %1341 = vmatpush1.msra.mxu0 0.0
    %1342 = vmatprep.subr.mxu0 0.0
    %1343 = vmatpush1.msra.mxu0 0.0
    %1344 = vmatprep.subr.mxu0 0.0
    %1345 = vmatpush1.msra.mxu0 0.0
    %1346 = vmatprep.subr.mxu0 0.0
    %1347 = vmatpush1.msra.mxu0 0.0
    %1348 = vmatprep.subr.mxu0 0.0
    %1349 = vmatpush1.msra.mxu0 0.0
    %1350 = vmatprep.subr.mxu0 0.0
    %1351 = vmatpush1.msra.mxu0 0.0
    %1352 = vmatprep.subr.mxu0 0.0
    %1353 = vmatpush1.msra.mxu0 0.0
    %1354 = vmatprep.subr.mxu0 0.0
    %1355 = vmatpush1.msra.mxu0 0.0
    %1356 = vmatprep.subr.mxu0 0.0
    %1357 = vmatpush1.msra.mxu0 0.0
    %1358 = vmatprep.subr.mxu0 0.0
    %1359 = vmatpush1.msra.mxu0 0.0
    %1360 = vmatprep.subr.mxu0 0.0
    %1361 = vmatpush1.msra.mxu0 0.0
    %1362 = vmatprep.subr.mxu0 0.0
    %1363 = vmatpush1.msra.mxu0 0.0
    %1364 = vmatprep.subr.mxu0 0.0
    %1365 = vmatpush1.msra.mxu0 0.0
    %1366 = vmatprep.subr.mxu0 0.0
    %1367 = vmatpush1.msra.mxu0 0.0
    %1368 = vmatprep.subr.mxu0 0.0
    %1369 = vmatpush1.msra.mxu0 0.0
    %1370 = vmatprep.mubr.f32.mxu0 0.0
    %1371 = vmatmul.mubr.f32.gmra.mrb[0].mxu0 %v481
    %v1372 = vpop.f32.mrb[0].mxu0
    %v1373 = vadd.f32 0.0, %v1372
    %v1374 = vpop.f32.mrb[0].mxu0
    %1375 = vmatprep.mubr.f32.mxu0 0.0
    %1376 = vmatmul.mubr.f32.gmra.mrb[0].mxu0 %v484
    %v1377 = vpop.f32.mrb[0].mxu0
    %v1378 = vadd.f32 0.0, %v1377
    %v1379 = vpop.f32.mrb[0].mxu0
    %1380 = vdwg.mxu0
    %1381 = vmatprep.subr.mxu0 0.0
    %1382 = vmatpush1.msra.mxu0 %v1304
    %1383 = vmatprep.subr.mxu0 0.0
    %1384 = vmatpush1.msra.mxu0 %v1305
    %1385 = vmatprep.subr.mxu0 0.0
    %1386 = vmatpush1.msra.mxu0 0.0
    %1387 = vmatprep.subr.mxu0 0.0
    %1388 = vmatpush1.msra.mxu0 0.0
    %1389 = vmatprep.subr.mxu0 0.0
    %1390 = vmatpush1.msra.mxu0 0.0
    %1391 = vmatprep.subr.mxu0 0.0
    %1392 = vmatpush1.msra.mxu0 0.0
    %1393 = vmatprep.subr.mxu0 0.0
    %1394 = vmatpush1.msra.mxu0 0.0
    %1395 = vmatprep.subr.mxu0 0.0
    %1396 = vmatpush1.msra.mxu0 0.0
    %1397 = vmatprep.subr.mxu0 0.0
    %1398 = vmatpush1.msra.mxu0 0.0
    %1399 = vmatprep.subr.mxu0 0.0
    %1400 = vmatpush1.msra.mxu0 0.0
    %1401 = vmatprep.subr.mxu0 0.0
    %1402 = vmatpush1.msra.mxu0 0.0
    %1403 = vmatprep.subr.mxu0 0.0
    %1404 = vmatpush1.msra.mxu0 0.0
    %1405 = vmatprep.subr.mxu0 0.0
    %1406 = vmatpush1.msra.mxu0 0.0
    %1407 = vmatprep.subr.mxu0 0.0
    %1408 = vmatpush1.msra.mxu0 0.0
    %1409 = vmatprep.subr.mxu0 0.0
    %1410 = vmatpush1.msra.mxu0 0.0
    %1411 = vmatprep.subr.mxu0 0.0
    %1412 = vmatpush1.msra.mxu0 0.0
    %1413 = vmatprep.subr.mxu0 0.0
    %1414 = vmatpush1.msra.mxu0 0.0
    %1415 = vmatprep.subr.mxu0 0.0
    %1416 = vmatpush1.msra.mxu0 0.0
    %1417 = vmatprep.subr.mxu0 0.0
    %1418 = vmatpush1.msra.mxu0 0.0
    %1419 = vmatprep.subr.mxu0 0.0
    %1420 = vmatpush1.msra.mxu0 0.0
    %1421 = vmatprep.subr.mxu0 0.0
    %1422 = vmatpush1.msra.mxu0 0.0
    %1423 = vmatprep.subr.mxu0 0.0
    %1424 = vmatpush1.msra.mxu0 0.0
    %1425 = vmatprep.subr.mxu0 0.0
    %1426 = vmatpush1.msra.mxu0 0.0
    %1427 = vmatprep.subr.mxu0 0.0
    %1428 = vmatpush1.msra.mxu0 0.0
    %1429 = vmatprep.subr.mxu0 0.0
    %1430 = vmatpush1.msra.mxu0 0.0
    %1431 = vmatprep.subr.mxu0 0.0
    %1432 = vmatpush1.msra.mxu0 0.0
    %1433 = vmatprep.subr.mxu0 0.0
    %1434 = vmatpush1.msra.mxu0 0.0
    %1435 = vmatprep.subr.mxu0 0.0
    %1436 = vmatpush1.msra.mxu0 0.0
    %1437 = vmatprep.subr.mxu0 0.0
    %1438 = vmatpush1.msra.mxu0 0.0
    %1439 = vmatprep.subr.mxu0 0.0
    %1440 = vmatpush1.msra.mxu0 0.0
    %1441 = vmatprep.subr.mxu0 0.0
    %1442 = vmatpush1.msra.mxu0 0.0
    %1443 = vmatprep.subr.mxu0 0.0
    %1444 = vmatpush1.msra.mxu0 0.0
    %1445 = vmatprep.mubr.f32.mxu0 0.0
    %1446 = vmatmul.mubr.f32.gmra.mrb[0].mxu0 %v562
    %v1447 = vpop.f32.mrb[0].mxu0
    %v1448 = vadd.f32 %v1373, %v1447
    %v1449 = vpop.f32.mrb[0].mxu0
    %1450 = vmatprep.mubr.f32.mxu0 0.0
    %1451 = vmatmul.mubr.f32.gmra.mrb[0].mxu0 %v565
    %v1452 = vpop.f32.mrb[0].mxu0
    %v1453 = vadd.f32 %v1378, %v1452
    %v1454 = vpop.f32.mrb[0].mxu0
    %1455 = vdwg.mxu0
    %v1456 = vadd.f32 %v1448, %v645
    %v1457 = vadd.f32 %v1453, %v650
    %v1458 = vmax.f32 %v1456, 0.0
    %v1459 = vmax.f32 %v1457, 0.0
    %1460 = vmatprep.subr.mxu0 0.0
    %1461 = vmatpush1.msra.mxu0 %v1458
    %1462 = vmatprep.subr.mxu0 0.0
    %1463 = vmatpush1.msra.mxu0 %v1459
    %1464 = vmatprep.subr.mxu0 0.0
    %1465 = vmatpush1.msra.mxu0 0.0
    %1466 = vmatprep.subr.mxu0 0.0
    %1467 = vmatpush1.msra.mxu0 0.0
    %1468 = vmatprep.subr.mxu0 0.0
    %1469 = vmatpush1.msra.mxu0 0.0
    %1470 = vmatprep.subr.mxu0 0.0
    %1471 = vmatpush1.msra.mxu0 0.0
    %1472 = vmatprep.subr.mxu0 0.0
    %1473 = vmatpush1.msra.mxu0 0.0
    %1474 = vmatprep.subr.mxu0 0.0
    %1475 = vmatpush1.msra.mxu0 0.0
    %1476 = vmatprep.subr.mxu0 0.0
    %1477 = vmatpush1.msra.mxu0 0.0
    %1478 = vmatprep.subr.mxu0 0.0
    %1479 = vmatpush1.msra.mxu0 0.0
    %1480 = vmatprep.subr.mxu0 0.0
    %1481 = vmatpush1.msra.mxu0 0.0
    %1482 = vmatprep.subr.mxu0 0.0
    %1483 = vmatpush1.msra.mxu0 0.0
    %1484 = vmatprep.subr.mxu0 0.0
    %1485 = vmatpush1.msra.mxu0 0.0
    %1486 = vmatprep.subr.mxu0 0.0
    %1487 = vmatpush1.msra.mxu0 0.0
    %1488 = vmatprep.subr.mxu0 0.0
    %1489 = vmatpush1.msra.mxu0 0.0
    %1490 = vmatprep.subr.mxu0 0.0
    %1491 = vmatpush1.msra.mxu0 0.0
    %1492 = vmatprep.subr.mxu0 0.0
    %1493 = vmatpush1.msra.mxu0 0.0
    %1494 = vmatprep.subr.mxu0 0.0
    %1495 = vmatpush1.msra.mxu0 0.0
    %1496 = vmatprep.subr.mxu0 0.0
    %1497 = vmatpush1.msra.mxu0 0.0
    %1498 = vmatprep.subr.mxu0 0.0
    %1499 = vmatpush1.msra.mxu0 0.0
    %1500 = vmatprep.subr.mxu0 0.0
    %1501 = vmatpush1.msra.mxu0 0.0
    %1502 = vmatprep.subr.mxu0 0.0
    %1503 = vmatpush1.msra.mxu0 0.0
    %1504 = vmatprep.subr.mxu0 0.0
    %1505 = vmatpush1.msra.mxu0 0.0
    %1506 = vmatprep.subr.mxu0 0.0
    %1507 = vmatpush1.msra.mxu0 0.0
    %1508 = vmatprep.subr.mxu0 0.0
    %1509 = vmatpush1.msra.mxu0 0.0
    %1510 = vmatprep.subr.mxu0 0.0
    %1511 = vmatpush1.msra.mxu0 0.0
    %1512 = vmatprep.subr.mxu0 0.0
    %1513 = vmatpush1.msra.mxu0 0.0
    %1514 = vmatprep.subr.mxu0 0.0
    %1515 = vmatpush1.msra.mxu0 0.0
    %1516 = vmatprep.subr.mxu0 0.0
    %1517 = vmatpush1.msra.mxu0 0.0
    %1518 = vmatprep.subr.mxu0 0.0
    %1519 = vmatpush1.msra.mxu0 0.0
    %1520 = vmatprep.subr.mxu0 0.0
    %1521 = vmatpush1.msra.mxu0 0.0
    %1522 = vmatprep.subr.mxu0 0.0
    %1523 = vmatpush1.msra.mxu0 0.0
    %1524 = vmatprep.mubr.f32.mxu0 0.0
    %1525 = vmatmul.mubr.f32.gmra.mrb[0].mxu0 %v667
    %v1526 = vpop.f32.mrb[0].mxu0
    %v1527 = vadd.f32 %v659, %v1526
    %v1528 = vpop.f32.mrb[0].mxu0
    %1529 = vmatprep.mubr.f32.mxu0 0.0
    %1530 = vmatmul.mubr.f32.gmra.mrb[0].mxu0 %v670
    %v1531 = vpop.f32.mrb[0].mxu0
    %v1532 = vadd.f32 %v664, %v1531
    %v1533 = vpop.f32.mrb[0].mxu0
    %1534 = vdwg.mxu0
    %v1535 = vmax.f32 %v1527, 0.0
    %v1536 = vmax.f32 %v1532, 0.0
    %v1537 = vmax.f32 %v1132, %v1535
    %v1538 = vmax.f32 %v1133, %v1536
    %v1539 = vsub.f32 %v1132, %v1537
    %v1540 = vsub.f32 %v1133, %v1538
    %v1541 = vmul.f32 %v1539, 1.442695
    %v1542 = vpow.pop %v1541
    %v1543 = vmul.f32 %v1540, 1.442695
    %v1544 = vpow.pop %v1543
    %v1545 = vsub.f32 %v1535, %v1537
    %v1546 = vsub.f32 %v1536, %v1538
    %v1547 = vmul.f32 %v1545, 1.442695
    %v1548 = vpow.pop %v1547
    %v1549 = vmul.f32 %v1546, 1.442695
    %v1550 = vpow.pop %v1549
    %v1551 = vmul.f32 %v1542, %v1146
    %v1552 = vmul.f32 %v1544, %v1147
    %v1553 = vadd.f32 %v1551, %v1548
    %v1554 = vadd.f32 %v1552, %v1550
    %v1555 = vmul.f32 %v1542, %v1152
    %v1556 = vmul.f32 %v1544, %v1153
    %v1557 = vmul.f32 %v1548, %v1264
    %v1558 = vmul.f32 %v1550, %v1265
    %v1559 = vadd.f32 %v1555, %v1557
    %v1560 = vadd.f32 %v1556, %v1558
    %s1561 = scalar_lea.vmem %s3, 48
    %v1562 = vld [vmem:[%s1561] sm:$0xff]
    %v1563 = vld [vmem:[%s1561 + $0x8] sm:$0xff]
    %s1564 = scalar_lea.vmem %s1, 6
    %v1565 = vld [vmem:[%s1564] sm:$0x3]
    %1566 = vmatprep.subr.mxu0 0.0
    %1567 = vmatpush1.msra.mxu0 %v1562
    %1568 = vmatprep.subr.mxu0 0.0
    %1569 = vmatpush1.msra.mxu0 %v1563
    %1570 = vmatprep.subr.mxu0 0.0
    %1571 = vmatpush1.msra.mxu0 0.0
    %1572 = vmatprep.subr.mxu0 0.0
    %1573 = vmatpush1.msra.mxu0 0.0
    %1574 = vmatprep.subr.mxu0 0.0
    %1575 = vmatpush1.msra.mxu0 0.0
    %1576 = vmatprep.subr.mxu0 0.0
    %1577 = vmatpush1.msra.mxu0 0.0
    %1578 = vmatprep.subr.mxu0 0.0
    %1579 = vmatpush1.msra.mxu0 0.0
    %1580 = vmatprep.subr.mxu0 0.0
    %1581 = vmatpush1.msra.mxu0 0.0
    %1582 = vmatprep.subr.mxu0 0.0
    %1583 = vmatpush1.msra.mxu0 0.0
    %1584 = vmatprep.subr.mxu0 0.0
    %1585 = vmatpush1.msra.mxu0 0.0
    %1586 = vmatprep.subr.mxu0 0.0
    %1587 = vmatpush1.msra.mxu0 0.0
    %1588 = vmatprep.subr.mxu0 0.0
    %1589 = vmatpush1.msra.mxu0 0.0
    %1590 = vmatprep.subr.mxu0 0.0
    %1591 = vmatpush1.msra.mxu0 0.0
    %1592 = vmatprep.subr.mxu0 0.0
    %1593 = vmatpush1.msra.mxu0 0.0
    %1594 = vmatprep.subr.mxu0 0.0
    %1595 = vmatpush1.msra.mxu0 0.0
    %1596 = vmatprep.subr.mxu0 0.0
    %1597 = vmatpush1.msra.mxu0 0.0
    %1598 = vmatprep.subr.mxu0 0.0
    %1599 = vmatpush1.msra.mxu0 0.0
    %1600 = vmatprep.subr.mxu0 0.0
    %1601 = vmatpush1.msra.mxu0 0.0
    %1602 = vmatprep.subr.mxu0 0.0
    %1603 = vmatpush1.msra.mxu0 0.0
    %1604 = vmatprep.subr.mxu0 0.0
    %1605 = vmatpush1.msra.mxu0 0.0
    %1606 = vmatprep.subr.mxu0 0.0
    %1607 = vmatpush1.msra.mxu0 0.0
    %1608 = vmatprep.subr.mxu0 0.0
    %1609 = vmatpush1.msra.mxu0 0.0
    %1610 = vmatprep.subr.mxu0 0.0
    %1611 = vmatpush1.msra.mxu0 0.0
    %1612 = vmatprep.subr.mxu0 0.0
    %1613 = vmatpush1.msra.mxu0 0.0
    %1614 = vmatprep.subr.mxu0 0.0
    %1615 = vmatpush1.msra.mxu0 0.0
    %1616 = vmatprep.subr.mxu0 0.0
    %1617 = vmatpush1.msra.mxu0 0.0
    %1618 = vmatprep.subr.mxu0 0.0
    %1619 = vmatpush1.msra.mxu0 0.0
    %1620 = vmatprep.subr.mxu0 0.0
    %1621 = vmatpush1.msra.mxu0 0.0
    %1622 = vmatprep.subr.mxu0 0.0
    %1623 = vmatpush1.msra.mxu0 0.0
    %1624 = vmatprep.subr.mxu0 0.0
    %1625 = vmatpush1.msra.mxu0 0.0
    %1626 = vmatprep.subr.mxu0 0.0
    %1627 = vmatpush1.msra.mxu0 0.0
    %1628 = vmatprep.subr.mxu0 0.0
    %1629 = vmatpush1.msra.mxu0 0.0
    %1630 = vmatprep.mubr.f32.mxu0 0.0
    %1631 = vmatmul.mubr.f32.gmra.mrb[0].mxu0 %v294
    %v1632 = vpop.f32.mrb[0].mxu0
    %v1633 = vadd.f32 %v276, %v1632
    %v1634 = vpop.f32.mrb[0].mxu0
    %1635 = vmatprep.mubr.f32.mxu0 0.0
    %1636 = vmatmul.mubr.f32.gmra.mrb[0].mxu0 %v297
    %v1637 = vpop.f32.mrb[0].mxu0
    %v1638 = vadd.f32 %v281, %v1637
    %v1639 = vpop.f32.mrb[0].mxu0
    %1640 = vmatprep.mubr.f32.mxu0 0.0
    %1641 = vmatmul.mubr.f32.gmra.mrb[0].mxu0 %v300
    %v1642 = vpop.f32.mrb[0].mxu0
    %v1643 = vadd.f32 %v286, %v1642
    %v1644 = vpop.f32.mrb[0].mxu0
    %1645 = vmatprep.mubr.f32.mxu0 0.0
    %1646 = vmatmul.mubr.f32.gmra.mrb[0].mxu0 %v303
    %v1647 = vpop.f32.mrb[0].mxu0
    %v1648 = vadd.f32 %v291, %v1647
    %v1649 = vpop.f32.mrb[0].mxu0
    %1650 = vdwg.mxu0
    %v1651 = vxor.u32 %v1633, 2147483648
    %v1652 = vxor.u32 %v1638, 2147483648
    %v1653 = vmul.f32 %v1651, 1.442695
    %v1654 = vpow.pop %v1653
    %v1655 = vmul.f32 %v1652, 1.442695
    %v1656 = vpow.pop %v1655
    %v1657 = vadd.f32 %v1654, 1.0
    %v1658 = vadd.f32 %v1656, 1.0
    %v1659 = vrcp.pop %v1657
    %v1660 = vmul.f32 1.0, %v1659
    %v1661 = vrcp.pop %v1658
    %v1662 = vmul.f32 1.0, %v1661
    %v1663 = vmul.f32 %v1660, %v1643
    %v1664 = vmul.f32 %v1662, %v1648
    %v1665 = vadd.f32 %v1663, %v224
    %v1666 = vadd.f32 %v1664, %v225
    %v1667 = vadd.f32 %v1660, %v221
    %v1668 = vadd.f32 %v1662, %v223
    %v1669 = vrcp.pop %v1667
    %v1670 = vrcp.pop %v1668
    %v1671 = vmul.f32 %v1665, %v1669
    %v1672 = vmul.f32 %v1666, %v1670
    %v1673 = vsub.f32 %v1565, %v57
    %v1674 = vmul.f32 %v1673, %v1673
    %v1676 = vrot.slane %v1674, 1
    %v1678 = vadd.f32 %v1674, %v1676
    %v1679 = vadd.f32 %v1678, 1e-20
    %v1680 = vrsqrt.pop %v1679
    %v1681 = vmul.f32 %v1679, %v1680
    %vm1682 = vcmp.eq.f32.partialorder %v1679, inf
    %v1683 = vsel %vm1682, %v1679, %v1681
    %vm1684 = vcmp.eq.f32.partialorder %v1679, 0.0
    %v1685 = vand.u32 %v1679, 2147483648
    %v1686 = vsel %vm1684, %v1685, %v1683
    %v1687 = vlaneseq
    %v1688 = vshrl.u32 %v1687, 7
    %v1689 = vsub.s32 0, %v1688
    %v1690 = vrot.slane %v1565, %v1689
    %v1691 = vmul.f32 %v429, %v1690
    %v1692 = vmul.f32 %v434, %v1690
    %v1693 = vlaneseq
    %v1694 = vshrl.u32 %v1693, 7
    %v1695 = vsub.s32 1, %v1694
    %v1696 = vrot.slane %v1565, %v1695
    %v1697 = vmul.f32 %v444, %v1696
    %v1698 = vmul.f32 %v448, %v1696
    %v1699 = vadd.f32 %v1691, %v1697
    %v1700 = vadd.f32 %v1692, %v1698
    %v1701 = vadd.f32 %v268, %v1699
    %v1702 = vadd.f32 %v269, %v1700
    %v1703 = vlaneseq
    %v1704 = vshrl.u32 %v1703, 7
    %v1705 = vsub.s32 0, %v1704
    %v1706 = vrot.slane %v1686, %v1705
    %v1707 = vmul.f32 %v463, %v1706
    %v1708 = vmul.f32 %v468, %v1706
    %v1709 = vadd.f32 %v1701, %v1707
    %v1710 = vadd.f32 %v1702, %v1708
    %v1711 = vmax.f32 %v1709, 0.0
    %v1712 = vmax.f32 %v1710, 0.0
    %1713 = vmatprep.subr.mxu0 0.0
    %1714 = vmatpush1.msra.mxu0 %v1671
    %1715 = vmatprep.subr.mxu0 0.0
    %1716 = vmatpush1.msra.mxu0 %v1672
    %1717 = vmatprep.subr.mxu0 0.0
    %1718 = vmatpush1.msra.mxu0 0.0
    %1719 = vmatprep.subr.mxu0 0.0
    %1720 = vmatpush1.msra.mxu0 0.0
    %1721 = vmatprep.subr.mxu0 0.0
    %1722 = vmatpush1.msra.mxu0 0.0
    %1723 = vmatprep.subr.mxu0 0.0
    %1724 = vmatpush1.msra.mxu0 0.0
    %1725 = vmatprep.subr.mxu0 0.0
    %1726 = vmatpush1.msra.mxu0 0.0
    %1727 = vmatprep.subr.mxu0 0.0
    %1728 = vmatpush1.msra.mxu0 0.0
    %1729 = vmatprep.subr.mxu0 0.0
    %1730 = vmatpush1.msra.mxu0 0.0
    %1731 = vmatprep.subr.mxu0 0.0
    %1732 = vmatpush1.msra.mxu0 0.0
    %1733 = vmatprep.subr.mxu0 0.0
    %1734 = vmatpush1.msra.mxu0 0.0
    %1735 = vmatprep.subr.mxu0 0.0
    %1736 = vmatpush1.msra.mxu0 0.0
    %1737 = vmatprep.subr.mxu0 0.0
    %1738 = vmatpush1.msra.mxu0 0.0
    %1739 = vmatprep.subr.mxu0 0.0
    %1740 = vmatpush1.msra.mxu0 0.0
    %1741 = vmatprep.subr.mxu0 0.0
    %1742 = vmatpush1.msra.mxu0 0.0
    %1743 = vmatprep.subr.mxu0 0.0
    %1744 = vmatpush1.msra.mxu0 0.0
    %1745 = vmatprep.subr.mxu0 0.0
    %1746 = vmatpush1.msra.mxu0 0.0
    %1747 = vmatprep.subr.mxu0 0.0
    %1748 = vmatpush1.msra.mxu0 0.0
    %1749 = vmatprep.subr.mxu0 0.0
    %1750 = vmatpush1.msra.mxu0 0.0
    %1751 = vmatprep.subr.mxu0 0.0
    %1752 = vmatpush1.msra.mxu0 0.0
    %1753 = vmatprep.subr.mxu0 0.0
    %1754 = vmatpush1.msra.mxu0 0.0
    %1755 = vmatprep.subr.mxu0 0.0
    %1756 = vmatpush1.msra.mxu0 0.0
    %1757 = vmatprep.subr.mxu0 0.0
    %1758 = vmatpush1.msra.mxu0 0.0
    %1759 = vmatprep.subr.mxu0 0.0
    %1760 = vmatpush1.msra.mxu0 0.0
    %1761 = vmatprep.subr.mxu0 0.0
    %1762 = vmatpush1.msra.mxu0 0.0
    %1763 = vmatprep.subr.mxu0 0.0
    %1764 = vmatpush1.msra.mxu0 0.0
    %1765 = vmatprep.subr.mxu0 0.0
    %1766 = vmatpush1.msra.mxu0 0.0
    %1767 = vmatprep.subr.mxu0 0.0
    %1768 = vmatpush1.msra.mxu0 0.0
    %1769 = vmatprep.subr.mxu0 0.0
    %1770 = vmatpush1.msra.mxu0 0.0
    %1771 = vmatprep.subr.mxu0 0.0
    %1772 = vmatpush1.msra.mxu0 0.0
    %1773 = vmatprep.subr.mxu0 0.0
    %1774 = vmatpush1.msra.mxu0 0.0
    %1775 = vmatprep.subr.mxu0 0.0
    %1776 = vmatpush1.msra.mxu0 0.0
    %1777 = vmatprep.mubr.f32.mxu0 0.0
    %1778 = vmatmul.mubr.f32.gmra.mrb[0].mxu0 %v481
    %v1779 = vpop.f32.mrb[0].mxu0
    %v1780 = vadd.f32 0.0, %v1779
    %v1781 = vpop.f32.mrb[0].mxu0
    %1782 = vmatprep.mubr.f32.mxu0 0.0
    %1783 = vmatmul.mubr.f32.gmra.mrb[0].mxu0 %v484
    %v1784 = vpop.f32.mrb[0].mxu0
    %v1785 = vadd.f32 0.0, %v1784
    %v1786 = vpop.f32.mrb[0].mxu0
    %1787 = vdwg.mxu0
    %1788 = vmatprep.subr.mxu0 0.0
    %1789 = vmatpush1.msra.mxu0 %v1711
    %1790 = vmatprep.subr.mxu0 0.0
    %1791 = vmatpush1.msra.mxu0 %v1712
    %1792 = vmatprep.subr.mxu0 0.0
    %1793 = vmatpush1.msra.mxu0 0.0
    %1794 = vmatprep.subr.mxu0 0.0
    %1795 = vmatpush1.msra.mxu0 0.0
    %1796 = vmatprep.subr.mxu0 0.0
    %1797 = vmatpush1.msra.mxu0 0.0
    %1798 = vmatprep.subr.mxu0 0.0
    %1799 = vmatpush1.msra.mxu0 0.0
    %1800 = vmatprep.subr.mxu0 0.0
    %1801 = vmatpush1.msra.mxu0 0.0
    %1802 = vmatprep.subr.mxu0 0.0
    %1803 = vmatpush1.msra.mxu0 0.0
    %1804 = vmatprep.subr.mxu0 0.0
    %1805 = vmatpush1.msra.mxu0 0.0
    %1806 = vmatprep.subr.mxu0 0.0
    %1807 = vmatpush1.msra.mxu0 0.0
    %1808 = vmatprep.subr.mxu0 0.0
    %1809 = vmatpush1.msra.mxu0 0.0
    %1810 = vmatprep.subr.mxu0 0.0
    %1811 = vmatpush1.msra.mxu0 0.0
    %1812 = vmatprep.subr.mxu0 0.0
    %1813 = vmatpush1.msra.mxu0 0.0
    %1814 = vmatprep.subr.mxu0 0.0
    %1815 = vmatpush1.msra.mxu0 0.0
    %1816 = vmatprep.subr.mxu0 0.0
    %1817 = vmatpush1.msra.mxu0 0.0
    %1818 = vmatprep.subr.mxu0 0.0
    %1819 = vmatpush1.msra.mxu0 0.0
    %1820 = vmatprep.subr.mxu0 0.0
    %1821 = vmatpush1.msra.mxu0 0.0
    %1822 = vmatprep.subr.mxu0 0.0
    %1823 = vmatpush1.msra.mxu0 0.0
    %1824 = vmatprep.subr.mxu0 0.0
    %1825 = vmatpush1.msra.mxu0 0.0
    %1826 = vmatprep.subr.mxu0 0.0
    %1827 = vmatpush1.msra.mxu0 0.0
    %1828 = vmatprep.subr.mxu0 0.0
    %1829 = vmatpush1.msra.mxu0 0.0
    %1830 = vmatprep.subr.mxu0 0.0
    %1831 = vmatpush1.msra.mxu0 0.0
    %1832 = vmatprep.subr.mxu0 0.0
    %1833 = vmatpush1.msra.mxu0 0.0
    %1834 = vmatprep.subr.mxu0 0.0
    %1835 = vmatpush1.msra.mxu0 0.0
    %1836 = vmatprep.subr.mxu0 0.0
    %1837 = vmatpush1.msra.mxu0 0.0
    %1838 = vmatprep.subr.mxu0 0.0
    %1839 = vmatpush1.msra.mxu0 0.0
    %1840 = vmatprep.subr.mxu0 0.0
    %1841 = vmatpush1.msra.mxu0 0.0
    %1842 = vmatprep.subr.mxu0 0.0
    %1843 = vmatpush1.msra.mxu0 0.0
    %1844 = vmatprep.subr.mxu0 0.0
    %1845 = vmatpush1.msra.mxu0 0.0
    %1846 = vmatprep.subr.mxu0 0.0
    %1847 = vmatpush1.msra.mxu0 0.0
    %1848 = vmatprep.subr.mxu0 0.0
    %1849 = vmatpush1.msra.mxu0 0.0
    %1850 = vmatprep.subr.mxu0 0.0
    %1851 = vmatpush1.msra.mxu0 0.0
    %1852 = vmatprep.mubr.f32.mxu0 0.0
    %1853 = vmatmul.mubr.f32.gmra.mrb[0].mxu0 %v562
    %v1854 = vpop.f32.mrb[0].mxu0
    %v1855 = vadd.f32 %v1780, %v1854
    %v1856 = vpop.f32.mrb[0].mxu0
    %1857 = vmatprep.mubr.f32.mxu0 0.0
    %1858 = vmatmul.mubr.f32.gmra.mrb[0].mxu0 %v565
    %v1859 = vpop.f32.mrb[0].mxu0
    %v1860 = vadd.f32 %v1785, %v1859
    %v1861 = vpop.f32.mrb[0].mxu0
    %1862 = vdwg.mxu0
    %v1863 = vadd.f32 %v1855, %v645
    %v1864 = vadd.f32 %v1860, %v650
    %v1865 = vmax.f32 %v1863, 0.0
    %v1866 = vmax.f32 %v1864, 0.0
    %1867 = vmatprep.subr.mxu0 0.0
    %1868 = vmatpush1.msra.mxu0 %v1865
    %1869 = vmatprep.subr.mxu0 0.0
    %1870 = vmatpush1.msra.mxu0 %v1866
    %1871 = vmatprep.subr.mxu0 0.0
    %1872 = vmatpush1.msra.mxu0 0.0
    %1873 = vmatprep.subr.mxu0 0.0
    %1874 = vmatpush1.msra.mxu0 0.0
    %1875 = vmatprep.subr.mxu0 0.0
    %1876 = vmatpush1.msra.mxu0 0.0
    %1877 = vmatprep.subr.mxu0 0.0
    %1878 = vmatpush1.msra.mxu0 0.0
    %1879 = vmatprep.subr.mxu0 0.0
    %1880 = vmatpush1.msra.mxu0 0.0
    %1881 = vmatprep.subr.mxu0 0.0
    %1882 = vmatpush1.msra.mxu0 0.0
    %1883 = vmatprep.subr.mxu0 0.0
    %1884 = vmatpush1.msra.mxu0 0.0
    %1885 = vmatprep.subr.mxu0 0.0
    %1886 = vmatpush1.msra.mxu0 0.0
    %1887 = vmatprep.subr.mxu0 0.0
    %1888 = vmatpush1.msra.mxu0 0.0
    %1889 = vmatprep.subr.mxu0 0.0
    %1890 = vmatpush1.msra.mxu0 0.0
    %1891 = vmatprep.subr.mxu0 0.0
    %1892 = vmatpush1.msra.mxu0 0.0
    %1893 = vmatprep.subr.mxu0 0.0
    %1894 = vmatpush1.msra.mxu0 0.0
    %1895 = vmatprep.subr.mxu0 0.0
    %1896 = vmatpush1.msra.mxu0 0.0
    %1897 = vmatprep.subr.mxu0 0.0
    %1898 = vmatpush1.msra.mxu0 0.0
    %1899 = vmatprep.subr.mxu0 0.0
    %1900 = vmatpush1.msra.mxu0 0.0
    %1901 = vmatprep.subr.mxu0 0.0
    %1902 = vmatpush1.msra.mxu0 0.0
    %1903 = vmatprep.subr.mxu0 0.0
    %1904 = vmatpush1.msra.mxu0 0.0
    %1905 = vmatprep.subr.mxu0 0.0
    %1906 = vmatpush1.msra.mxu0 0.0
    %1907 = vmatprep.subr.mxu0 0.0
    %1908 = vmatpush1.msra.mxu0 0.0
    %1909 = vmatprep.subr.mxu0 0.0
    %1910 = vmatpush1.msra.mxu0 0.0
    %1911 = vmatprep.subr.mxu0 0.0
    %1912 = vmatpush1.msra.mxu0 0.0
    %1913 = vmatprep.subr.mxu0 0.0
    %1914 = vmatpush1.msra.mxu0 0.0
    %1915 = vmatprep.subr.mxu0 0.0
    %1916 = vmatpush1.msra.mxu0 0.0
    %1917 = vmatprep.subr.mxu0 0.0
    %1918 = vmatpush1.msra.mxu0 0.0
    %1919 = vmatprep.subr.mxu0 0.0
    %1920 = vmatpush1.msra.mxu0 0.0
    %1921 = vmatprep.subr.mxu0 0.0
    %1922 = vmatpush1.msra.mxu0 0.0
    %1923 = vmatprep.subr.mxu0 0.0
    %1924 = vmatpush1.msra.mxu0 0.0
    %1925 = vmatprep.subr.mxu0 0.0
    %1926 = vmatpush1.msra.mxu0 0.0
    %1927 = vmatprep.subr.mxu0 0.0
    %1928 = vmatpush1.msra.mxu0 0.0
    %1929 = vmatprep.subr.mxu0 0.0
    %1930 = vmatpush1.msra.mxu0 0.0
    %1931 = vmatprep.mubr.f32.mxu0 0.0
    %1932 = vmatmul.mubr.f32.gmra.mrb[0].mxu0 %v667
    %v1933 = vpop.f32.mrb[0].mxu0
    %v1934 = vadd.f32 %v659, %v1933
    %v1935 = vpop.f32.mrb[0].mxu0
    %1936 = vmatprep.mubr.f32.mxu0 0.0
    %1937 = vmatmul.mubr.f32.gmra.mrb[0].mxu0 %v670
    %v1938 = vpop.f32.mrb[0].mxu0
    %v1939 = vadd.f32 %v664, %v1938
    %v1940 = vpop.f32.mrb[0].mxu0
    %1941 = vdwg.mxu0
    %v1942 = vmax.f32 %v1934, 0.0
    %v1943 = vmax.f32 %v1939, 0.0
    %v1944 = vmax.f32 %v1537, %v1942
    %v1945 = vmax.f32 %v1538, %v1943
    %v1946 = vsub.f32 %v1537, %v1944
    %v1947 = vsub.f32 %v1538, %v1945
    %v1948 = vmul.f32 %v1946, 1.442695
    %v1949 = vpow.pop %v1948
    %v1950 = vmul.f32 %v1947, 1.442695
    %v1951 = vpow.pop %v1950
    %v1952 = vsub.f32 %v1942, %v1944
    %v1953 = vsub.f32 %v1943, %v1945
    %v1954 = vmul.f32 %v1952, 1.442695
    %v1955 = vpow.pop %v1954
    %v1956 = vmul.f32 %v1953, 1.442695
    %v1957 = vpow.pop %v1956
    %v1958 = vmul.f32 %v1949, %v1553
    %v1959 = vmul.f32 %v1951, %v1554
    %v1960 = vadd.f32 %v1958, %v1955
    %v1961 = vadd.f32 %v1959, %v1957
    %v1962 = vmul.f32 %v1949, %v1559
    %v1963 = vmul.f32 %v1951, %v1560
    %v1964 = vmul.f32 %v1955, %v1671
    %v1965 = vmul.f32 %v1957, %v1672
    %v1966 = vadd.f32 %v1962, %v1964
    %v1967 = vadd.f32 %v1963, %v1965
    %v1968 = vrcp.pop %v1960
    %v1969 = vrcp.pop %v1961
    %v1970 = vmul.f32 %v1966, %v1968
    %v1971 = vmul.f32 %v1967, %v1969
    %1972 = vst [vmem:[#allocation2] sm:$0xff] %v1970
    %1973 = vst [vmem:[#allocation2 + $0x8] sm:$0xff] %v1971
    // Predicated region
    $region70: #{tpu_custom_call.1} parent=1 // pred_check
      _
    $region71: #{tpu_custom_call.1} parent=1 // pred_check_branch
      %1975 = sbr.rel (0) target = $region73
    $region72: #{tpu_custom_call.1} parent=1 // pred_region
      %s1977 = ssub.s32 256, 256
      %1978 = vsyncadd [#allocation3], %s1977
      %s1979 = sshll.u32 [#allocation2], 4
      %s1980 = int_to_ptr.vmem [resolvable:$true] %s1979
      %1985 = dma.vmem_to_hbm [thread:$0]  %s1980, 256, %s17, [#allocation3], 128, 128, 8
    $region73: #{tpu_custom_call.1} parent=1 // pred_fallthru
      _
    // Predicated region
    $region74: #{tpu_custom_call.1} parent=1 // pred_check
      _
    $region75: #{tpu_custom_call.1} parent=1 // pred_check_branch
      %1987 = sbr.rel (0) target = $region77
    $region76: #{tpu_custom_call.1} parent=1 // pred_region
      %1988 = dma.done [#allocation3], 256
    $region77: #{tpu_custom_call.1} parent=1 // pred_fallthru
      _
    %1989 = vsyncpa [#allocation3], 1

</llo_original>
